<compile_context>
chip_gen: v7x
topology: tpu7x:2x2x1
jax: 0.10.0
libtpu: 0.0.40
codegen_flags: <defaults>
</compile_context>

<pallas_src>
import functools

import jax
import jax.numpy as jnp
from jax.experimental import pallas as pl
from jax.experimental.pallas import tpu as pltpu


def _lstm_fc_sigmoid_kernel(x_ref, wih_ref, whh_ref, b_ref, fcw_ref, fcb_ref,
                            out_ref, *, T, Bb):
    """One batch-block of the LSTM recurrence + final FC + sigmoid.

    x_ref   : (T*Bb, D)   float32, VMEM  (time-major rows: row = t*Bb + b)
    wih_ref : (D, 4*Hp)   float32, VMEM  (W_ih^T, PyTorch gate order [i,f,g,o], lane-padded)
    whh_ref : (Hp, 4*Hp)  float32, VMEM  (W_hh^T, row+col padded)
    b_ref   : (1, 4*Hp)   float32, VMEM  (b_ih + b_hh, padded)
    fcw_ref : (1, Hp)     float32, VMEM  (fc weight row, padded)
    fcb_ref : (1, 1)      float32, VMEM
    out_ref : (Bb, 1)     float32, VMEM
    """
    Hp = whh_ref.shape[0]          # padded hidden width (multiple of 128)

    # ---- One-shot input projection for every timestep (bias folded in). ----
    xproj = (jnp.dot(x_ref[...], wih_ref[...],
                     preferred_element_type=jnp.float32)
             + b_ref[...])                              # (T*Bb, 4*Hp), time-major

    h = jnp.zeros((Bb, Hp), jnp.float32)
    c = jnp.zeros((Bb, Hp), jnp.float32)

    # ---- Statically unrolled recurrence: one MXU push per step. ----
    for t in range(T):
        gates = xproj[t * Bb:(t + 1) * Bb, :] + jnp.dot(
            h, whh_ref[...], preferred_element_type=jnp.float32)   # (Bb, 4Hp) [i,f,g,o]
        # c-critical EUP work first: sigmoid(i,f) and tanh(g) feed the c update.
        if_g = jax.nn.sigmoid(gates[:, :2 * Hp])                   # [i | f]
        g_g = jnp.tanh(gates[:, 2 * Hp:3 * Hp])                    # g
        c = if_g[:, Hp:] * c + if_g[:, :Hp] * g_g
        # o-gate sigmoid only feeds h after tanh(c); issue it after the c update.
        o_g = jax.nn.sigmoid(gates[:, 3 * Hp:])
        h = o_g * jnp.tanh(c)

    # ---- Final FC as VPU mul + lane reduce; padded lanes of fcw are 0. ----
    logits = jnp.sum(h * fcw_ref[...], axis=-1, keepdims=True) + fcb_ref[...]
    out_ref[...] = jax.nn.sigmoid(logits)


def _pack_gate_cols(w_t, H, Hp):
    """(K, 4H) columns in PyTorch gate order [i, f, g, o] -> (K, 4*Hp): each gate
    block zero-padded from H to Hp columns (lane-aligned), order preserved."""
    pad = lambda blk: jnp.pad(blk, ((0, 0), (0, Hp - H)))
    return jnp.concatenate(
        [pad(w_t[:, g * H:(g + 1) * H]) for g in range(4)], axis=1)


@functools.partial(jax.jit, static_argnames=("batch_blocks",))
def seizure_lstm_forward(x, w_ih, w_hh, b_ih, b_hh, fc_w, fc_b,
                         batch_blocks=None):
    """Matches SeizureLSTM.forward.

    x    : (B, T, D) float32 (batch_first)
    w_ih : (4H, D), w_hh : (4H, H), b_ih/b_hh : (4H,)   (PyTorch gate order i,f,g,o)
    fc_w : (1, H),  fc_b : (1,)
    batch_blocks: number of batch blocks in the grid (parallel across TensorCores
                  on v7x).  Default: 2 if B is even and > 1, else 1.
    returns (B, 1) float32 in (0, 1).
    """
    B, T, D = x.shape
    H = w_hh.shape[1]
    Hp = ((H + 127) // 128) * 128   # pad each gate block to full 128-lane tiles
    G = 4 * Hp

    if batch_blocks is None:
        batch_blocks = 2 if (B > 1 and B % 2 == 0) else 1
    assert B % batch_blocks == 0, "batch_blocks must divide the batch"
    nb = batch_blocks
    Bb = B // nb

    x_f = x.astype(jnp.float32)
    # Time-major reorder per batch block (tiny one-time XLA op): row = t*Bb + b.
    x_tm = (x_f.reshape(nb, Bb, T, D)
                .transpose(0, 2, 1, 3)
                .reshape(nb, T * Bb, D))

    wih_p = _pack_gate_cols(jnp.transpose(w_ih).astype(jnp.float32), H, Hp)   # (D, 4Hp)
    whh_p = _pack_gate_cols(jnp.transpose(w_hh).astype(jnp.float32), H, Hp)   # (H, 4Hp)
    whh_p = jnp.pad(whh_p, ((0, Hp - H), (0, 0)))                             # (Hp, 4Hp)
    b_p = _pack_gate_cols((b_ih + b_hh).reshape(1, 4 * H).astype(jnp.float32),
                          H, Hp)                                              # (1, 4Hp)
    fcw_p = jnp.pad(fc_w.astype(jnp.float32), ((0, 0), (0, Hp - H)))          # (1, Hp)
    fcb = fc_b.reshape(1, 1).astype(jnp.float32)                              # (1, 1)

    kernel = functools.partial(_lstm_fc_sigmoid_kernel, T=T, Bb=Bb)

    out = pl.pallas_call(
        kernel,
        out_shape=jax.ShapeDtypeStruct((nb, Bb, 1), jnp.float32),
        grid=(nb,),
        in_specs=[
            pl.BlockSpec((None, T * Bb, D), lambda b: (b, 0, 0)),   # x (time-major block)
            pl.BlockSpec((D, G), lambda b: (0, 0)),                 # W_ih^T
            pl.BlockSpec((Hp, G), lambda b: (0, 0)),                # W_hh^T
            pl.BlockSpec((1, G), lambda b: (0, 0)),                 # bias
            pl.BlockSpec((1, Hp), lambda b: (0, 0)),                # fc weight
            pl.BlockSpec((1, 1), lambda b: (0, 0)),                 # fc bias
        ],
        out_specs=pl.BlockSpec((None, Bb, 1), lambda b: (b, 0, 0)),
        compiler_params=pltpu.CompilerParams(
            dimension_semantics=("parallel",)),
    )(x_tm, wih_p, whh_p, b_p, fcw_p, fcb)

    return out.reshape(B, 1)


def _reference_forward(x, w_ih, w_hh, b_ih, b_hh, fc_w, fc_b):
    """Pure-JAX reference replicating torch.nn.LSTM + Linear + Sigmoid."""
    B, T, D = x.shape
    H = w_hh.shape[1]
    h = jnp.zeros((B, H), jnp.float32)
    c = jnp.zeros((B, H), jnp.float32)
    for t in range(T):
        gates = x[:, t, :] @ w_ih.T + h @ w_hh.T + b_ih + b_hh
        i = jax.nn.sigmoid(gates[:, 0:H])
        f = jax.nn.sigmoid(gates[:, H:2 * H])
        g = jnp.tanh(gates[:, 2 * H:3 * H])
        o = jax.nn.sigmoid(gates[:, 3 * H:4 * H])
        c = f * c + i * g
        h = o * jnp.tanh(c)
    return jax.nn.sigmoid(h @ fc_w.T + fc_b)


if __name__ == "__main__":
    # Module defaults: input_size=18, hidden_size=64, num_layers=1.
    B, T, D, H = 2, 8, 18, 64

    key = jax.random.PRNGKey(0)
    keys = jax.random.split(key, 7)
    k = 1.0 / jnp.sqrt(jnp.float32(H))  # PyTorch default U(-1/sqrt(H), 1/sqrt(H))

    w_ih = jax.random.uniform(keys[0], (4 * H, D), jnp.float32, -k, k)
    w_hh = jax.random.uniform(keys[1], (4 * H, H), jnp.float32, -k, k)
    b_ih = jax.random.uniform(keys[2], (4 * H,), jnp.float32, -k, k)
    b_hh = jax.random.uniform(keys[3], (4 * H,), jnp.float32, -k, k)
    fc_w = jax.random.uniform(keys[4], (1, H), jnp.float32, -k, k)
    fc_b = jax.random.uniform(keys[5], (1,), jnp.float32, -k, k)
    x = jax.random.normal(keys[6], (B, T, D), jnp.float32)

    ref = _reference_forward(x, w_ih, w_hh, b_ih, b_hh, fc_w, fc_b)

    # Default path: batch-parallel grid (2 blocks -> both TCs on v7x).
    out = jax.block_until_ready(
        seizure_lstm_forward(x, w_ih, w_hh, b_ih, b_hh, fc_w, fc_b))
    assert out.shape == (B, 1)
    assert bool(jnp.all(jnp.isfinite(out)))
    err = float(jnp.max(jnp.abs(out - ref)))
    assert err < 1e-5, f"kernel (grid) mismatch vs reference: max abs err = {err}"

    # Single-block path (what you'd use on single-TC chips for tiny batches).
    out1 = jax.block_until_ready(
        seizure_lstm_forward(x, w_ih, w_hh, b_ih, b_hh, fc_w, fc_b,
                             batch_blocks=1))
    err1 = float(jnp.max(jnp.abs(out1 - ref)))
    assert err1 < 1e-5, f"kernel (single block) mismatch: max abs err = {err1}"

    print("KERNEL_OK")
</pallas_src>

<mosaic_0001>
module attributes {stable_mosaic.version = 11 : i64} {
  func.func @_lstm_fc_sigmoid_kernel(%arg0: i32, %arg1: memref<1x8x18xf32, #tpu.memory_space<vmem>>, %arg2: memref<18x512xf32, #tpu.memory_space<vmem>>, %arg3: memref<128x512xf32, #tpu.memory_space<vmem>>, %arg4: memref<1x512xf32, #tpu.memory_space<vmem>>, %arg5: memref<1x128xf32, #tpu.memory_space<vmem>>, %arg6: memref<1x1xf32, #tpu.memory_space<vmem>>, %arg7: memref<1x1x1xf32, #tpu.memory_space<vmem>>) attributes {dimension_semantics = [#tpu.dimension_semantics<parallel>], iteration_bounds = array<i64: 2>, scalar_prefetch = 0 : i64, scratch_operands = 0 : i64, tpu.core_type = #tpu.core_type<tc>, window_params = [{transform_indices = @transform_0, window_bounds = array<i64: 1, 8, 18>}, {pipeline_mode = #tpu.pipeline_mode<synchronous>, transform_indices = @transform_1, window_bounds = array<i64: 18, 512>}, {pipeline_mode = #tpu.pipeline_mode<synchronous>, transform_indices = @transform_2, window_bounds = array<i64: 128, 512>}, {pipeline_mode = #tpu.pipeline_mode<synchronous>, transform_indices = @transform_3, window_bounds = array<i64: 1, 512>}, {pipeline_mode = #tpu.pipeline_mode<synchronous>, transform_indices = @transform_4, window_bounds = array<i64: 1, 128>}, {pipeline_mode = #tpu.pipeline_mode<synchronous>, transform_indices = @transform_5, window_bounds = array<i64: 1, 1>}, {transform_indices = @transform_6, window_bounds = array<i64: 1, 1, 1>}]} {
    %c0 = arith.constant 0 : index
    %c0_0 = arith.constant 0 : index
    %c0_1 = arith.constant 0 : index
    %0 = vector.load %arg1[%c0, %c0_0, %c0_1] : memref<1x8x18xf32, #tpu.memory_space<vmem>>, vector<1x8x18xf32>
    %1 = vector.shape_cast %0 : vector<1x8x18xf32> to vector<8x18xf32>
    %c0_2 = arith.constant 0 : index
    %c0_3 = arith.constant 0 : index
    %2 = vector.load %arg2[%c0_2, %c0_3] : memref<18x512xf32, #tpu.memory_space<vmem>>, vector<18x512xf32>
    %cst = arith.constant dense<0.000000e+00> : vector<8x512xf32>
    %3 = tpu.matmul %1, %2, %cst {dimension_numbers = #tpu.dot_dimension_numbers<[1], [0], [0], [1], [0, 0, 1, 1], [], []>} : vector<8x18xf32>, vector<18x512xf32>, vector<8x512xf32> -> vector<8x512xf32>
    %c0_4 = arith.constant 0 : index
    %c0_5 = arith.constant 0 : index
    %4 = vector.load %arg4[%c0_4, %c0_5] : memref<1x512xf32, #tpu.memory_space<vmem>>, vector<1x512xf32>
    %5 = vector.broadcast %4 : vector<1x512xf32> to vector<8x512xf32>
    %6 = arith.addf %3, %5 : vector<8x512xf32>
    %cst_6 = arith.constant 0.000000e+00 : f32
    %7 = vector.broadcast %cst_6 : f32 to vector<1x128xf32>
    %cst_7 = arith.constant 0.000000e+00 : f32
    %8 = vector.broadcast %cst_7 : f32 to vector<1x128xf32>
    %9 = vector.extract_strided_slice %6 {offsets = [0, 0], sizes = [1, 512], strides = [1, 1]} : vector<8x512xf32> to vector<1x512xf32>
    %c0_8 = arith.constant 0 : index
    %c0_9 = arith.constant 0 : index
    %10 = vector.load %arg3[%c0_8, %c0_9] : memref<128x512xf32, #tpu.memory_space<vmem>>, vector<128x512xf32>
    %cst_10 = arith.constant dense<0.000000e+00> : vector<1x512xf32>
    %11 = tpu.matmul %7, %10, %cst_10 {dimension_numbers = #tpu.dot_dimension_numbers<[1], [0], [0], [1], [0, 0, 1, 1], [], []>} : vector<1x128xf32>, vector<128x512xf32>, vector<1x512xf32> -> vector<1x512xf32>
    %12 = arith.addf %9, %11 : vector<1x512xf32>
    %13 = vector.extract_strided_slice %12 {offsets = [0, 0], sizes = [1, 256], strides = [1, 1]} : vector<1x512xf32> to vector<1x256xf32>
    %14 = arith.negf %13 : vector<1x256xf32>
    %15 = math.exp %14 : vector<1x256xf32>
    %cst_11 = arith.constant 1.000000e+00 : f32
    %16 = vector.broadcast %cst_11 : f32 to vector<1x256xf32>
    %17 = arith.addf %16, %15 : vector<1x256xf32>
    %18 = arith.divf %16, %17 : vector<1x256xf32>
    %19 = vector.extract_strided_slice %12 {offsets = [0, 256], sizes = [1, 128], strides = [1, 1]} : vector<1x512xf32> to vector<1x128xf32>
    %20 = math.tanh %19 : vector<1x128xf32>
    %21 = vector.extract_strided_slice %18 {offsets = [0, 128], sizes = [1, 128], strides = [1, 1]} : vector<1x256xf32> to vector<1x128xf32>
    %22 = arith.mulf %21, %8 : vector<1x128xf32>
    %23 = vector.extract_strided_slice %18 {offsets = [0, 0], sizes = [1, 128], strides = [1, 1]} : vector<1x256xf32> to vector<1x128xf32>
    %24 = arith.mulf %23, %20 : vector<1x128xf32>
    %25 = arith.addf %22, %24 : vector<1x128xf32>
    %26 = vector.extract_strided_slice %12 {offsets = [0, 384], sizes = [1, 128], strides = [1, 1]} : vector<1x512xf32> to vector<1x128xf32>
    %27 = arith.negf %26 : vector<1x128xf32>
    %28 = math.exp %27 : vector<1x128xf32>
    %cst_12 = arith.constant 1.000000e+00 : f32
    %29 = vector.broadcast %cst_12 : f32 to vector<1x128xf32>
    %30 = arith.addf %29, %28 : vector<1x128xf32>
    %31 = arith.divf %29, %30 : vector<1x128xf32>
    %32 = math.tanh %25 : vector<1x128xf32>
    %33 = arith.mulf %31, %32 : vector<1x128xf32>
    %34 = vector.extract_strided_slice %6 {offsets = [1, 0], sizes = [1, 512], strides = [1, 1]} : vector<8x512xf32> to vector<1x512xf32>
    %c0_13 = arith.constant 0 : index
    %c0_14 = arith.constant 0 : index
    %35 = vector.load %arg3[%c0_13, %c0_14] : memref<128x512xf32, #tpu.memory_space<vmem>>, vector<128x512xf32>
    %cst_15 = arith.constant dense<0.000000e+00> : vector<1x512xf32>
    %36 = tpu.matmul %33, %35, %cst_15 {dimension_numbers = #tpu.dot_dimension_numbers<[1], [0], [0], [1], [0, 0, 1, 1], [], []>} : vector<1x128xf32>, vector<128x512xf32>, vector<1x512xf32> -> vector<1x512xf32>
    %37 = arith.addf %34, %36 : vector<1x512xf32>
    %38 = vector.extract_strided_slice %37 {offsets = [0, 0], sizes = [1, 256], strides = [1, 1]} : vector<1x512xf32> to vector<1x256xf32>
    %39 = arith.negf %38 : vector<1x256xf32>
    %40 = math.exp %39 : vector<1x256xf32>
    %cst_16 = arith.constant 1.000000e+00 : f32
    %41 = vector.broadcast %cst_16 : f32 to vector<1x256xf32>
    %42 = arith.addf %41, %40 : vector<1x256xf32>
    %43 = arith.divf %41, %42 : vector<1x256xf32>
    %44 = vector.extract_strided_slice %37 {offsets = [0, 256], sizes = [1, 128], strides = [1, 1]} : vector<1x512xf32> to vector<1x128xf32>
    %45 = math.tanh %44 : vector<1x128xf32>
    %46 = vector.extract_strided_slice %43 {offsets = [0, 128], sizes = [1, 128], strides = [1, 1]} : vector<1x256xf32> to vector<1x128xf32>
    %47 = arith.mulf %46, %25 : vector<1x128xf32>
    %48 = vector.extract_strided_slice %43 {offsets = [0, 0], sizes = [1, 128], strides = [1, 1]} : vector<1x256xf32> to vector<1x128xf32>
    %49 = arith.mulf %48, %45 : vector<1x128xf32>
    %50 = arith.addf %47, %49 : vector<1x128xf32>
    %51 = vector.extract_strided_slice %37 {offsets = [0, 384], sizes = [1, 128], strides = [1, 1]} : vector<1x512xf32> to vector<1x128xf32>
    %52 = arith.negf %51 : vector<1x128xf32>
    %53 = math.exp %52 : vector<1x128xf32>
    %cst_17 = arith.constant 1.000000e+00 : f32
    %54 = vector.broadcast %cst_17 : f32 to vector<1x128xf32>
    %55 = arith.addf %54, %53 : vector<1x128xf32>
    %56 = arith.divf %54, %55 : vector<1x128xf32>
    %57 = math.tanh %50 : vector<1x128xf32>
    %58 = arith.mulf %56, %57 : vector<1x128xf32>
    %59 = vector.extract_strided_slice %6 {offsets = [2, 0], sizes = [1, 512], strides = [1, 1]} : vector<8x512xf32> to vector<1x512xf32>
    %c0_18 = arith.constant 0 : index
    %c0_19 = arith.constant 0 : index
    %60 = vector.load %arg3[%c0_18, %c0_19] : memref<128x512xf32, #tpu.memory_space<vmem>>, vector<128x512xf32>
    %cst_20 = arith.constant dense<0.000000e+00> : vector<1x512xf32>
    %61 = tpu.matmul %58, %60, %cst_20 {dimension_numbers = #tpu.dot_dimension_numbers<[1], [0], [0], [1], [0, 0, 1, 1], [], []>} : vector<1x128xf32>, vector<128x512xf32>, vector<1x512xf32> -> vector<1x512xf32>
    %62 = arith.addf %59, %61 : vector<1x512xf32>
    %63 = vector.extract_strided_slice %62 {offsets = [0, 0], sizes = [1, 256], strides = [1, 1]} : vector<1x512xf32> to vector<1x256xf32>
    %64 = arith.negf %63 : vector<1x256xf32>
    %65 = math.exp %64 : vector<1x256xf32>
    %cst_21 = arith.constant 1.000000e+00 : f32
    %66 = vector.broadcast %cst_21 : f32 to vector<1x256xf32>
    %67 = arith.addf %66, %65 : vector<1x256xf32>
    %68 = arith.divf %66, %67 : vector<1x256xf32>
    %69 = vector.extract_strided_slice %62 {offsets = [0, 256], sizes = [1, 128], strides = [1, 1]} : vector<1x512xf32> to vector<1x128xf32>
    %70 = math.tanh %69 : vector<1x128xf32>
    %71 = vector.extract_strided_slice %68 {offsets = [0, 128], sizes = [1, 128], strides = [1, 1]} : vector<1x256xf32> to vector<1x128xf32>
    %72 = arith.mulf %71, %50 : vector<1x128xf32>
    %73 = vector.extract_strided_slice %68 {offsets = [0, 0], sizes = [1, 128], strides = [1, 1]} : vector<1x256xf32> to vector<1x128xf32>
    %74 = arith.mulf %73, %70 : vector<1x128xf32>
    %75 = arith.addf %72, %74 : vector<1x128xf32>
    %76 = vector.extract_strided_slice %62 {offsets = [0, 384], sizes = [1, 128], strides = [1, 1]} : vector<1x512xf32> to vector<1x128xf32>
    %77 = arith.negf %76 : vector<1x128xf32>
    %78 = math.exp %77 : vector<1x128xf32>
    %cst_22 = arith.constant 1.000000e+00 : f32
    %79 = vector.broadcast %cst_22 : f32 to vector<1x128xf32>
    %80 = arith.addf %79, %78 : vector<1x128xf32>
    %81 = arith.divf %79, %80 : vector<1x128xf32>
    %82 = math.tanh %75 : vector<1x128xf32>
    %83 = arith.mulf %81, %82 : vector<1x128xf32>
    %84 = vector.extract_strided_slice %6 {offsets = [3, 0], sizes = [1, 512], strides = [1, 1]} : vector<8x512xf32> to vector<1x512xf32>
    %c0_23 = arith.constant 0 : index
    %c0_24 = arith.constant 0 : index
    %85 = vector.load %arg3[%c0_23, %c0_24] : memref<128x512xf32, #tpu.memory_space<vmem>>, vector<128x512xf32>
    %cst_25 = arith.constant dense<0.000000e+00> : vector<1x512xf32>
    %86 = tpu.matmul %83, %85, %cst_25 {dimension_numbers = #tpu.dot_dimension_numbers<[1], [0], [0], [1], [0, 0, 1, 1], [], []>} : vector<1x128xf32>, vector<128x512xf32>, vector<1x512xf32> -> vector<1x512xf32>
    %87 = arith.addf %84, %86 : vector<1x512xf32>
    %88 = vector.extract_strided_slice %87 {offsets = [0, 0], sizes = [1, 256], strides = [1, 1]} : vector<1x512xf32> to vector<1x256xf32>
    %89 = arith.negf %88 : vector<1x256xf32>
    %90 = math.exp %89 : vector<1x256xf32>
    %cst_26 = arith.constant 1.000000e+00 : f32
    %91 = vector.broadcast %cst_26 : f32 to vector<1x256xf32>
    %92 = arith.addf %91, %90 : vector<1x256xf32>
    %93 = arith.divf %91, %92 : vector<1x256xf32>
    %94 = vector.extract_strided_slice %87 {offsets = [0, 256], sizes = [1, 128], strides = [1, 1]} : vector<1x512xf32> to vector<1x128xf32>
    %95 = math.tanh %94 : vector<1x128xf32>
    %96 = vector.extract_strided_slice %93 {offsets = [0, 128], sizes = [1, 128], strides = [1, 1]} : vector<1x256xf32> to vector<1x128xf32>
    %97 = arith.mulf %96, %75 : vector<1x128xf32>
    %98 = vector.extract_strided_slice %93 {offsets = [0, 0], sizes = [1, 128], strides = [1, 1]} : vector<1x256xf32> to vector<1x128xf32>
    %99 = arith.mulf %98, %95 : vector<1x128xf32>
    %100 = arith.addf %97, %99 : vector<1x128xf32>
    %101 = vector.extract_strided_slice %87 {offsets = [0, 384], sizes = [1, 128], strides = [1, 1]} : vector<1x512xf32> to vector<1x128xf32>
    %102 = arith.negf %101 : vector<1x128xf32>
    %103 = math.exp %102 : vector<1x128xf32>
    %cst_27 = arith.constant 1.000000e+00 : f32
    %104 = vector.broadcast %cst_27 : f32 to vector<1x128xf32>
    %105 = arith.addf %104, %103 : vector<1x128xf32>
    %106 = arith.divf %104, %105 : vector<1x128xf32>
    %107 = math.tanh %100 : vector<1x128xf32>
    %108 = arith.mulf %106, %107 : vector<1x128xf32>
    %109 = vector.extract_strided_slice %6 {offsets = [4, 0], sizes = [1, 512], strides = [1, 1]} : vector<8x512xf32> to vector<1x512xf32>
    %c0_28 = arith.constant 0 : index
    %c0_29 = arith.constant 0 : index
    %110 = vector.load %arg3[%c0_28, %c0_29] : memref<128x512xf32, #tpu.memory_space<vmem>>, vector<128x512xf32>
    %cst_30 = arith.constant dense<0.000000e+00> : vector<1x512xf32>
    %111 = tpu.matmul %108, %110, %cst_30 {dimension_numbers = #tpu.dot_dimension_numbers<[1], [0], [0], [1], [0, 0, 1, 1], [], []>} : vector<1x128xf32>, vector<128x512xf32>, vector<1x512xf32> -> vector<1x512xf32>
    %112 = arith.addf %109, %111 : vector<1x512xf32>
    %113 = vector.extract_strided_slice %112 {offsets = [0, 0], sizes = [1, 256], strides = [1, 1]} : vector<1x512xf32> to vector<1x256xf32>
    %114 = arith.negf %113 : vector<1x256xf32>
    %115 = math.exp %114 : vector<1x256xf32>
    %cst_31 = arith.constant 1.000000e+00 : f32
    %116 = vector.broadcast %cst_31 : f32 to vector<1x256xf32>
    %117 = arith.addf %116, %115 : vector<1x256xf32>
    %118 = arith.divf %116, %117 : vector<1x256xf32>
    %119 = vector.extract_strided_slice %112 {offsets = [0, 256], sizes = [1, 128], strides = [1, 1]} : vector<1x512xf32> to vector<1x128xf32>
    %120 = math.tanh %119 : vector<1x128xf32>
    %121 = vector.extract_strided_slice %118 {offsets = [0, 128], sizes = [1, 128], strides = [1, 1]} : vector<1x256xf32> to vector<1x128xf32>
    %122 = arith.mulf %121, %100 : vector<1x128xf32>
    %123 = vector.extract_strided_slice %118 {offsets = [0, 0], sizes = [1, 128], strides = [1, 1]} : vector<1x256xf32> to vector<1x128xf32>
    %124 = arith.mulf %123, %120 : vector<1x128xf32>
    %125 = arith.addf %122, %124 : vector<1x128xf32>
    %126 = vector.extract_strided_slice %112 {offsets = [0, 384], sizes = [1, 128], strides = [1, 1]} : vector<1x512xf32> to vector<1x128xf32>
    %127 = arith.negf %126 : vector<1x128xf32>
    %128 = math.exp %127 : vector<1x128xf32>
    %cst_32 = arith.constant 1.000000e+00 : f32
    %129 = vector.broadcast %cst_32 : f32 to vector<1x128xf32>
    %130 = arith.addf %129, %128 : vector<1x128xf32>
    %131 = arith.divf %129, %130 : vector<1x128xf32>
    %132 = math.tanh %125 : vector<1x128xf32>
    %133 = arith.mulf %131, %132 : vector<1x128xf32>
    %134 = vector.extract_strided_slice %6 {offsets = [5, 0], sizes = [1, 512], strides = [1, 1]} : vector<8x512xf32> to vector<1x512xf32>
    %c0_33 = arith.constant 0 : index
    %c0_34 = arith.constant 0 : index
    %135 = vector.load %arg3[%c0_33, %c0_34] : memref<128x512xf32, #tpu.memory_space<vmem>>, vector<128x512xf32>
    %cst_35 = arith.constant dense<0.000000e+00> : vector<1x512xf32>
    %136 = tpu.matmul %133, %135, %cst_35 {dimension_numbers = #tpu.dot_dimension_numbers<[1], [0], [0], [1], [0, 0, 1, 1], [], []>} : vector<1x128xf32>, vector<128x512xf32>, vector<1x512xf32> -> vector<1x512xf32>
    %137 = arith.addf %134, %136 : vector<1x512xf32>
    %138 = vector.extract_strided_slice %137 {offsets = [0, 0], sizes = [1, 256], strides = [1, 1]} : vector<1x512xf32> to vector<1x256xf32>
    %139 = arith.negf %138 : vector<1x256xf32>
    %140 = math.exp %139 : vector<1x256xf32>
    %cst_36 = arith.constant 1.000000e+00 : f32
    %141 = vector.broadcast %cst_36 : f32 to vector<1x256xf32>
    %142 = arith.addf %141, %140 : vector<1x256xf32>
    %143 = arith.divf %141, %142 : vector<1x256xf32>
    %144 = vector.extract_strided_slice %137 {offsets = [0, 256], sizes = [1, 128], strides = [1, 1]} : vector<1x512xf32> to vector<1x128xf32>
    %145 = math.tanh %144 : vector<1x128xf32>
    %146 = vector.extract_strided_slice %143 {offsets = [0, 128], sizes = [1, 128], strides = [1, 1]} : vector<1x256xf32> to vector<1x128xf32>
    %147 = arith.mulf %146, %125 : vector<1x128xf32>
    %148 = vector.extract_strided_slice %143 {offsets = [0, 0], sizes = [1, 128], strides = [1, 1]} : vector<1x256xf32> to vector<1x128xf32>
    %149 = arith.mulf %148, %145 : vector<1x128xf32>
    %150 = arith.addf %147, %149 : vector<1x128xf32>
    %151 = vector.extract_strided_slice %137 {offsets = [0, 384], sizes = [1, 128], strides = [1, 1]} : vector<1x512xf32> to vector<1x128xf32>
    %152 = arith.negf %151 : vector<1x128xf32>
    %153 = math.exp %152 : vector<1x128xf32>
    %cst_37 = arith.constant 1.000000e+00 : f32
    %154 = vector.broadcast %cst_37 : f32 to vector<1x128xf32>
    %155 = arith.addf %154, %153 : vector<1x128xf32>
    %156 = arith.divf %154, %155 : vector<1x128xf32>
    %157 = math.tanh %150 : vector<1x128xf32>
    %158 = arith.mulf %156, %157 : vector<1x128xf32>
    %159 = vector.extract_strided_slice %6 {offsets = [6, 0], sizes = [1, 512], strides = [1, 1]} : vector<8x512xf32> to vector<1x512xf32>
    %c0_38 = arith.constant 0 : index
    %c0_39 = arith.constant 0 : index
    %160 = vector.load %arg3[%c0_38, %c0_39] : memref<128x512xf32, #tpu.memory_space<vmem>>, vector<128x512xf32>
    %cst_40 = arith.constant dense<0.000000e+00> : vector<1x512xf32>
    %161 = tpu.matmul %158, %160, %cst_40 {dimension_numbers = #tpu.dot_dimension_numbers<[1], [0], [0], [1], [0, 0, 1, 1], [], []>} : vector<1x128xf32>, vector<128x512xf32>, vector<1x512xf32> -> vector<1x512xf32>
    %162 = arith.addf %159, %161 : vector<1x512xf32>
    %163 = vector.extract_strided_slice %162 {offsets = [0, 0], sizes = [1, 256], strides = [1, 1]} : vector<1x512xf32> to vector<1x256xf32>
    %164 = arith.negf %163 : vector<1x256xf32>
    %165 = math.exp %164 : vector<1x256xf32>
    %cst_41 = arith.constant 1.000000e+00 : f32
    %166 = vector.broadcast %cst_41 : f32 to vector<1x256xf32>
    %167 = arith.addf %166, %165 : vector<1x256xf32>
    %168 = arith.divf %166, %167 : vector<1x256xf32>
    %169 = vector.extract_strided_slice %162 {offsets = [0, 256], sizes = [1, 128], strides = [1, 1]} : vector<1x512xf32> to vector<1x128xf32>
    %170 = math.tanh %169 : vector<1x128xf32>
    %171 = vector.extract_strided_slice %168 {offsets = [0, 128], sizes = [1, 128], strides = [1, 1]} : vector<1x256xf32> to vector<1x128xf32>
    %172 = arith.mulf %171, %150 : vector<1x128xf32>
    %173 = vector.extract_strided_slice %168 {offsets = [0, 0], sizes = [1, 128], strides = [1, 1]} : vector<1x256xf32> to vector<1x128xf32>
    %174 = arith.mulf %173, %170 : vector<1x128xf32>
    %175 = arith.addf %172, %174 : vector<1x128xf32>
    %176 = vector.extract_strided_slice %162 {offsets = [0, 384], sizes = [1, 128], strides = [1, 1]} : vector<1x512xf32> to vector<1x128xf32>
    %177 = arith.negf %176 : vector<1x128xf32>
    %178 = math.exp %177 : vector<1x128xf32>
    %cst_42 = arith.constant 1.000000e+00 : f32
    %179 = vector.broadcast %cst_42 : f32 to vector<1x128xf32>
    %180 = arith.addf %179, %178 : vector<1x128xf32>
    %181 = arith.divf %179, %180 : vector<1x128xf32>
    %182 = math.tanh %175 : vector<1x128xf32>
    %183 = arith.mulf %181, %182 : vector<1x128xf32>
    %184 = vector.extract_strided_slice %6 {offsets = [7, 0], sizes = [1, 512], strides = [1, 1]} : vector<8x512xf32> to vector<1x512xf32>
    %c0_43 = arith.constant 0 : index
    %c0_44 = arith.constant 0 : index
    %185 = vector.load %arg3[%c0_43, %c0_44] : memref<128x512xf32, #tpu.memory_space<vmem>>, vector<128x512xf32>
    %cst_45 = arith.constant dense<0.000000e+00> : vector<1x512xf32>
    %186 = tpu.matmul %183, %185, %cst_45 {dimension_numbers = #tpu.dot_dimension_numbers<[1], [0], [0], [1], [0, 0, 1, 1], [], []>} : vector<1x128xf32>, vector<128x512xf32>, vector<1x512xf32> -> vector<1x512xf32>
    %187 = arith.addf %184, %186 : vector<1x512xf32>
    %188 = vector.extract_strided_slice %187 {offsets = [0, 0], sizes = [1, 256], strides = [1, 1]} : vector<1x512xf32> to vector<1x256xf32>
    %189 = arith.negf %188 : vector<1x256xf32>
    %190 = math.exp %189 : vector<1x256xf32>
    %cst_46 = arith.constant 1.000000e+00 : f32
    %191 = vector.broadcast %cst_46 : f32 to vector<1x256xf32>
    %192 = arith.addf %191, %190 : vector<1x256xf32>
    %193 = arith.divf %191, %192 : vector<1x256xf32>
    %194 = vector.extract_strided_slice %187 {offsets = [0, 256], sizes = [1, 128], strides = [1, 1]} : vector<1x512xf32> to vector<1x128xf32>
    %195 = math.tanh %194 : vector<1x128xf32>
    %196 = vector.extract_strided_slice %193 {offsets = [0, 128], sizes = [1, 128], strides = [1, 1]} : vector<1x256xf32> to vector<1x128xf32>
    %197 = arith.mulf %196, %175 : vector<1x128xf32>
    %198 = vector.extract_strided_slice %193 {offsets = [0, 0], sizes = [1, 128], strides = [1, 1]} : vector<1x256xf32> to vector<1x128xf32>
    %199 = arith.mulf %198, %195 : vector<1x128xf32>
    %200 = arith.addf %197, %199 : vector<1x128xf32>
    %201 = vector.extract_strided_slice %187 {offsets = [0, 384], sizes = [1, 128], strides = [1, 1]} : vector<1x512xf32> to vector<1x128xf32>
    %202 = arith.negf %201 : vector<1x128xf32>
    %203 = math.exp %202 : vector<1x128xf32>
    %cst_47 = arith.constant 1.000000e+00 : f32
    %204 = vector.broadcast %cst_47 : f32 to vector<1x128xf32>
    %205 = arith.addf %204, %203 : vector<1x128xf32>
    %206 = arith.divf %204, %205 : vector<1x128xf32>
    %207 = math.tanh %200 : vector<1x128xf32>
    %208 = arith.mulf %206, %207 : vector<1x128xf32>
    %c0_48 = arith.constant 0 : index
    %c0_49 = arith.constant 0 : index
    %209 = vector.load %arg5[%c0_48, %c0_49] : memref<1x128xf32, #tpu.memory_space<vmem>>, vector<1x128xf32>
    %210 = arith.mulf %208, %209 : vector<1x128xf32>
    %cst_50 = arith.constant dense<0.000000e+00> : vector<1xf32>
    %211 = vector.multi_reduction <add>, %210, %cst_50 [1] : vector<1x128xf32> to vector<1xf32>
    %212 = vector.shape_cast %211 : vector<1xf32> to vector<1x1xf32>
    %c0_51 = arith.constant 0 : index
    %c0_52 = arith.constant 0 : index
    %213 = vector.load %arg6[%c0_51, %c0_52] : memref<1x1xf32, #tpu.memory_space<vmem>>, vector<1x1xf32>
    %214 = arith.addf %212, %213 : vector<1x1xf32>
    %215 = arith.negf %214 : vector<1x1xf32>
    %216 = math.exp %215 : vector<1x1xf32>
    %cst_53 = arith.constant 1.000000e+00 : f32
    %217 = vector.broadcast %cst_53 : f32 to vector<1x1xf32>
    %218 = arith.addf %217, %216 : vector<1x1xf32>
    %219 = arith.divf %217, %218 : vector<1x1xf32>
    %c0_54 = arith.constant 0 : index
    %c0_55 = arith.constant 0 : index
    %c0_56 = arith.constant 0 : index
    %220 = vector.load %arg7[%c0_54, %c0_55, %c0_56] : memref<1x1x1xf32, #tpu.memory_space<vmem>>, vector<1x1x1xf32>
    %221 = vector.shape_cast %220 : vector<1x1x1xf32> to vector<1x1xf32>
    %222 = vector.shape_cast %219 : vector<1x1xf32> to vector<1x1x1xf32>
    tpu.vector_store %arg7[%c0_54, %c0_55, %c0_56], %222 {strides = array<i32>} : memref<1x1x1xf32, #tpu.memory_space<vmem>>, vector<1x1x1xf32>,
    return
  }
  func.func @transform_0(%arg0: i32) -> (i32, i32, i32) {
    %c0_i32 = arith.constant 0 : i32
    %c0_i32_0 = arith.constant 0 : i32
    %c0_i32_1 = arith.constant 0 : i32
    return %arg0, %c0_i32, %c0_i32_0 : i32, i32, i32
  }
  func.func @transform_1(%arg0: i32) -> (i32, i32) {
    %c0_i32 = arith.constant 0 : i32
    %c0_i32_0 = arith.constant 0 : i32
    %c0_i32_1 = arith.constant 0 : i32
    return %c0_i32, %c0_i32_0 : i32, i32
  }
  func.func @transform_2(%arg0: i32) -> (i32, i32) {
    %c0_i32 = arith.constant 0 : i32
    %c0_i32_0 = arith.constant 0 : i32
    %c0_i32_1 = arith.constant 0 : i32
    return %c0_i32, %c0_i32_0 : i32, i32
  }
  func.func @transform_3(%arg0: i32) -> (i32, i32) {
    %c0_i32 = arith.constant 0 : i32
    %c0_i32_0 = arith.constant 0 : i32
    %c0_i32_1 = arith.constant 0 : i32
    return %c0_i32, %c0_i32_0 : i32, i32
  }
  func.func @transform_4(%arg0: i32) -> (i32, i32) {
    %c0_i32 = arith.constant 0 : i32
    %c0_i32_0 = arith.constant 0 : i32
    %c0_i32_1 = arith.constant 0 : i32
    return %c0_i32, %c0_i32_0 : i32, i32
  }
  func.func @transform_5(%arg0: i32) -> (i32, i32) {
    %c0_i32 = arith.constant 0 : i32
    %c0_i32_0 = arith.constant 0 : i32
    %c0_i32_1 = arith.constant 0 : i32
    return %c0_i32, %c0_i32_0 : i32, i32
  }
  func.func @transform_6(%arg0: i32) -> (i32, i32, i32) {
    %c0_i32 = arith.constant 0 : i32
    %c0_i32_0 = arith.constant 0 : i32
    %c0_i32_1 = arith.constant 0 : i32
    return %arg0, %c0_i32, %c0_i32_0 : i32, i32, i32
  }
}

</mosaic_0001>

<llo_original>
// kernel: seizure_lstm_forward.1
$region0: #{seizure_lstm_forward.1}
  #allocation0 [shape = 'u32[]', space=smem, size = 0x4, offset = 0x4, fixed_abs, tag = 'smem constant byte address 0x4 - core index']
  #allocation1 [shape = 'u32[144,128]{1,0:T(1,128)}', space=vmem, size = 0x12000, scoped, tag = 'internal scratch']
  #allocation2 [shape = 'f32[1,1]{1,0:T(1,128)S(1)}', space=vmem, size = 0x200, scoped, tag = 'scoped memory for seizure_lstm_forward.1']
  %s0 = inlined_call_operand.vmem [shape: f32[2,8,18], index: 0, kind: input, shape index: {}]
  %s1 = inlined_call_operand.vmem [shape: f32[18,512], index: 1, kind: input, shape index: {}]
  %s2 = inlined_call_operand.vmem [shape: f32[128,512], index: 2, kind: input, shape index: {}]
  %s3 = inlined_call_operand.vmem [shape: f32[1,512], index: 3, kind: input, shape index: {}]
  %s4 = inlined_call_operand.vmem [shape: f32[1,128], index: 4, kind: input, shape index: {}]
  %s5 = inlined_call_operand.<no memory space> [shape: f32[1,1], index: 5, kind: input, shape index: {}]
  %s6 = inlined_call_operand.vmem [shape: f32[2,1,1], index: 6, kind: output, shape index: {}]
  %s7 = sld [smem:[#allocation0]]
  $region57: #{seizure_lstm_forward.1} parent=0
    _
  %s9 = ssub.s32 1, %s7
  %s10 = scalar_select 0, %s9, %s7
  %v11 = vstv %s5
  %12 = vst [vmem:[#allocation2] sm:$0x1] %v11
  loop: start=0, step=1, limit=4
  $region2: #{seizure_lstm_forward.1} parent=0 // loop_pre_header
    _
  $region3: #{seizure_lstm_forward.1} parent=0 // loop_header
    %s14 = sphi 0, %s18
    %p15 = scmp.ge.s32.totalorder %s14, 4
    %s24 = sphi 0, %s26
    %s27 = sphi 0, %s24
    %s28 = sphi 0, %s27
    %s44 = sphi 0, %s28
    %s48 = sphi 0, %s48
    %s50 = sphi 0, %s48
    %s51 = sphi 0, %s50
    %s65 = sphi 0, %s51
    %s69 = sphi 0, %s69
    %s71 = sphi 0, %s69
    %s72 = sphi 0, %s71
    %s86 = sphi 0, %s72
    %s90 = sphi 0, %s90
    %s92 = sphi 0, %s90
    %s93 = sphi 0, %s92
    %s107 = sphi 0, %s93
    %s111 = sphi 0, %s111
    %s113 = sphi 0, %s111
    %s114 = sphi 0, %s113
    %s128 = sphi 0, %s114
    %s132 = sphi 0, %s132
    %s134 = sphi 0, %s132
    %s135 = sphi 0, %s134
    %s149 = sphi 0, %s135
    %s155 = sphi 0, %s157
    %s158 = sphi 0, %s155
    %s159 = sphi 0, %s158
    %s175 = sphi 0, %s159
  $region4: #{seizure_lstm_forward.1} parent=0 // loop_header_branch
    %17 = sbr.rel (%p15) target = $region8
  $region5: #{seizure_lstm_forward.1} parent=0 // loop_body
    %s19 = ssub.s32 %s14, 1
    %s20 = ssub.s32 %s14, 2
    %s21 = sadd.s32 %s14, 1
    %s22 = ssub.s32 %s14, %s21
    %p23 = scmp.eq.s32.totalorder %s22, 0
    %s25 = sadd.s32 %s24, 1
    %s26 = scalar_select %p23, %s24, %s25
    %p29 = pneg %p23
    %p30 = scmp.eq.s32.totalorder %s14, 1
    %p31 = por %p29, %p30
    %p32 = scmp.ne.s32.totalorder %s24, %s27
    %p33 = scmp.eq.s32.totalorder %s14, 0
    %p34 = por %p32, %p33
    %p35 = scmp.ne.s32.totalorder %s24, %s27
    %p36 = scmp.eq.s32.totalorder %s19, 1
    %p37 = por %p35, %p36
    %p38 = scmp.ne.s32.totalorder %s27, %s28
    %p39 = scmp.eq.s32.totalorder %s19, 0
    %p40 = por %p38, %p39
    %p41 = scmp.ne.s32.totalorder %s27, %s28
    %p42 = scmp.eq.s32.totalorder %s20, 1
    %p43 = por %p41, %p42
    %p45 = scmp.ne.s32.totalorder %s28, %s44
    %p46 = scmp.eq.s32.totalorder %s20, 0
    %p47 = por %p45, %p46
    %s49 = sadd.s32 %s48, 1
    %p52 = scmp.eq.s32.totalorder %s14, 1
    %p53 = scmp.ne.s32.totalorder %s48, %s50
    %p54 = scmp.eq.s32.totalorder %s14, 0
    %p55 = por %p53, %p54
    %p56 = scmp.ne.s32.totalorder %s48, %s50
    %p57 = scmp.eq.s32.totalorder %s19, 1
    %p58 = por %p56, %p57
    %p59 = scmp.ne.s32.totalorder %s50, %s51
    %p60 = scmp.eq.s32.totalorder %s19, 0
    %p61 = por %p59, %p60
    %p62 = scmp.ne.s32.totalorder %s50, %s51
    %p63 = scmp.eq.s32.totalorder %s20, 1
    %p64 = por %p62, %p63
    %p66 = scmp.ne.s32.totalorder %s51, %s65
    %p67 = scmp.eq.s32.totalorder %s20, 0
    %p68 = por %p66, %p67
    %s70 = sadd.s32 %s69, 1
    %p73 = scmp.eq.s32.totalorder %s14, 1
    %p74 = scmp.ne.s32.totalorder %s69, %s71
    %p75 = scmp.eq.s32.totalorder %s14, 0
    %p76 = por %p74, %p75
    %p77 = scmp.ne.s32.totalorder %s69, %s71
    %p78 = scmp.eq.s32.totalorder %s19, 1
    %p79 = por %p77, %p78
    %p80 = scmp.ne.s32.totalorder %s71, %s72
    %p81 = scmp.eq.s32.totalorder %s19, 0
    %p82 = por %p80, %p81
    %p83 = scmp.ne.s32.totalorder %s71, %s72
    %p84 = scmp.eq.s32.totalorder %s20, 1
    %p85 = por %p83, %p84
    %p87 = scmp.ne.s32.totalorder %s72, %s86
    %p88 = scmp.eq.s32.totalorder %s20, 0
    %p89 = por %p87, %p88
    %s91 = sadd.s32 %s90, 1
    %p94 = scmp.eq.s32.totalorder %s14, 1
    %p95 = scmp.ne.s32.totalorder %s90, %s92
    %p96 = scmp.eq.s32.totalorder %s14, 0
    %p97 = por %p95, %p96
    %p98 = scmp.ne.s32.totalorder %s90, %s92
    %p99 = scmp.eq.s32.totalorder %s19, 1
    %p100 = por %p98, %p99
    %p101 = scmp.ne.s32.totalorder %s92, %s93
    %p102 = scmp.eq.s32.totalorder %s19, 0
    %p103 = por %p101, %p102
    %p104 = scmp.ne.s32.totalorder %s92, %s93
    %p105 = scmp.eq.s32.totalorder %s20, 1
    %p106 = por %p104, %p105
    %p108 = scmp.ne.s32.totalorder %s93, %s107
    %p109 = scmp.eq.s32.totalorder %s20, 0
    %p110 = por %p108, %p109
    %s112 = sadd.s32 %s111, 1
    %p115 = scmp.eq.s32.totalorder %s14, 1
    %p116 = scmp.ne.s32.totalorder %s111, %s113
    %p117 = scmp.eq.s32.totalorder %s14, 0
    %p118 = por %p116, %p117
    %p119 = scmp.ne.s32.totalorder %s111, %s113
    %p120 = scmp.eq.s32.totalorder %s19, 1
    %p121 = por %p119, %p120
    %p122 = scmp.ne.s32.totalorder %s113, %s114
    %p123 = scmp.eq.s32.totalorder %s19, 0
    %p124 = por %p122, %p123
    %p125 = scmp.ne.s32.totalorder %s113, %s114
    %p126 = scmp.eq.s32.totalorder %s20, 1
    %p127 = por %p125, %p126
    %p129 = scmp.ne.s32.totalorder %s114, %s128
    %p130 = scmp.eq.s32.totalorder %s20, 0
    %p131 = por %p129, %p130
    %s133 = sadd.s32 %s132, 1
    %p136 = scmp.eq.s32.totalorder %s14, 1
    %p137 = scmp.ne.s32.totalorder %s132, %s134
    %p138 = scmp.eq.s32.totalorder %s14, 0
    %p139 = por %p137, %p138
    %p140 = scmp.ne.s32.totalorder %s132, %s134
    %p141 = scmp.eq.s32.totalorder %s19, 1
    %p142 = por %p140, %p141
    %p143 = scmp.ne.s32.totalorder %s134, %s135
    %p144 = scmp.eq.s32.totalorder %s19, 0
    %p145 = por %p143, %p144
    %p146 = scmp.ne.s32.totalorder %s134, %s135
    %p147 = scmp.eq.s32.totalorder %s20, 1
    %p148 = por %p146, %p147
    %p150 = scmp.ne.s32.totalorder %s135, %s149
    %p151 = scmp.eq.s32.totalorder %s20, 0
    %p152 = por %p150, %p151
    %s153 = ssub.s32 %s14, %s21
    %p154 = scmp.eq.s32.totalorder %s153, 0
    %s156 = sadd.s32 %s155, 1
    %s157 = scalar_select %p154, %s155, %s156
    %p160 = pneg %p154
    %p161 = scmp.eq.s32.totalorder %s14, 1
    %p162 = por %p160, %p161
    %p163 = scmp.ne.s32.totalorder %s155, %s158
    %p164 = scmp.eq.s32.totalorder %s14, 0
    %p165 = por %p163, %p164
    %p166 = scmp.ne.s32.totalorder %s155, %s158
    %p167 = scmp.eq.s32.totalorder %s19, 1
    %p168 = por %p166, %p167
    %p169 = scmp.ne.s32.totalorder %s158, %s159
    %p170 = scmp.eq.s32.totalorder %s19, 0
    %p171 = por %p169, %p170
    %p172 = scmp.ne.s32.totalorder %s158, %s159
    %p173 = scmp.eq.s32.totalorder %s20, 1
    %p174 = por %p172, %p173
    %p176 = scmp.ne.s32.totalorder %s159, %s175
    %p177 = scmp.eq.s32.totalorder %s20, 0
    %p178 = por %p176, %p177
    %p179 = scmp.le.s32.totalorder 1, %s14
    %p180 = scmp.lt.s32.totalorder %s14, 3
    %p181 = pnand %p179, %p180
    %p182 = pneg %p181
    // Predicated region
    $region9: #{seizure_lstm_forward.1} parent=5 // pred_check
      _
    $region10: #{seizure_lstm_forward.1} parent=5 // pred_check_branch
      %184 = sbr.rel (%p181) target = $region12
    $region11: #{seizure_lstm_forward.1} parent=5 // pred_region
      %s185 = ssub.s32 %s14, 1
      // Predicated region
      $region13: #{seizure_lstm_forward.1} parent=11 // pred_check
        %p186 = pneg %p61
      $region14: #{seizure_lstm_forward.1} parent=11 // pred_check_branch
        %188 = sbr.rel (%p186) target = $region16
      $region15: #{seizure_lstm_forward.1} parent=11 // pred_region
        _
      $region16: #{seizure_lstm_forward.1} parent=11 // pred_fallthru
        _
      // Predicated region
      $region17: #{seizure_lstm_forward.1} parent=11 // pred_check
        %p189 = pneg %p82
      $region18: #{seizure_lstm_forward.1} parent=11 // pred_check_branch
        %191 = sbr.rel (%p189) target = $region20
      $region19: #{seizure_lstm_forward.1} parent=11 // pred_region
        _
      $region20: #{seizure_lstm_forward.1} parent=11 // pred_fallthru
        _
      // Predicated region
      $region21: #{seizure_lstm_forward.1} parent=11 // pred_check
        %p192 = pneg %p103
      $region22: #{seizure_lstm_forward.1} parent=11 // pred_check_branch
        %194 = sbr.rel (%p192) target = $region24
      $region23: #{seizure_lstm_forward.1} parent=11 // pred_region
        _
      $region24: #{seizure_lstm_forward.1} parent=11 // pred_fallthru
        _
      // Predicated region
      $region25: #{seizure_lstm_forward.1} parent=11 // pred_check
        %p195 = pneg %p124
      $region26: #{seizure_lstm_forward.1} parent=11 // pred_check_branch
        %197 = sbr.rel (%p195) target = $region28
      $region27: #{seizure_lstm_forward.1} parent=11 // pred_region
        _
      $region28: #{seizure_lstm_forward.1} parent=11 // pred_fallthru
        _
      // Predicated region
      $region29: #{seizure_lstm_forward.1} parent=11 // pred_check
        %p198 = pneg %p145
      $region30: #{seizure_lstm_forward.1} parent=11 // pred_check_branch
        %200 = sbr.rel (%p198) target = $region32
      $region31: #{seizure_lstm_forward.1} parent=11 // pred_region
        _
      $region32: #{seizure_lstm_forward.1} parent=11 // pred_fallthru
        _
    $region12: #{seizure_lstm_forward.1} parent=5 // pred_fallthru
      _
    %p201 = scmp.lt.s32.totalorder %s14, 2
    // Predicated region
    $region33: #{seizure_lstm_forward.1} parent=5 // pred_check
      %p202 = pneg %p201
    $region34: #{seizure_lstm_forward.1} parent=5 // pred_check_branch
      %204 = sbr.rel (%p202) target = $region36
    $region35: #{seizure_lstm_forward.1} parent=5 // pred_region
      // Predicated region
      $region37: #{seizure_lstm_forward.1} parent=35 // pred_check
        %p205 = pneg %p34
      $region38: #{seizure_lstm_forward.1} parent=35 // pred_check_branch
        %207 = sbr.rel (%p205) target = $region40
      $region39: #{seizure_lstm_forward.1} parent=35 // pred_region
        %p208 = scmp.lt.s32.totalorder %s14, 1
        %s209 = scalar_select %p208, %s14, 1
        %s210 = smul.addr %s209, 8
        %s211 = scalar_lea.vmem %s0, %s210
      $region40: #{seizure_lstm_forward.1} parent=35 // pred_fallthru
        _
    $region36: #{seizure_lstm_forward.1} parent=5 // pred_fallthru
      _
    %p212 = scmp.le.s32.totalorder 1, %s14
    %p213 = scmp.lt.s32.totalorder %s14, 3
    %p214 = pnand %p212, %p213
    %p215 = pneg %p214
    // Predicated region
    $region41: #{seizure_lstm_forward.1} parent=5 // pred_check
      _
    $region42: #{seizure_lstm_forward.1} parent=5 // pred_check_branch
      %217 = sbr.rel (%p214) target = $region44
    $region43: #{seizure_lstm_forward.1} parent=5 // pred_region
      %s218 = ssub.s32 %s14, 1
      %p219 = scmp.lt.s32.totalorder %s19, 1
      %s220 = scalar_select %p219, %s19, 1
      %s221 = smul.addr %s220, 8
      %s222 = scalar_lea.vmem %s0, %s221
      %p223 = pneg %p40
      %p224 = pneg %p37
      %p225 = pneg %p61
      %p226 = pneg %p58
      %p227 = pneg %p82
      %p228 = pneg %p79
      %p229 = pneg %p103
      %p230 = pneg %p100
      %p231 = pneg %p124
      %p232 = pneg %p121
      %p233 = pneg %p145
      %p234 = pneg %p142
      %p235 = pneg %p171
      %p236 = pneg %p168
      %p237 = scmp.lt.s32.totalorder %s19, 1
      %s238 = scalar_select %p237, %s19, 1
      %s239 = scalar_lea.vmem %s6, %s238
      %p240 = scmp.lt.s32.totalorder %s19, 1
      %s241 = scalar_select %p240, %s19, 1
      %s242 = smul.addr %s241, 8
      %s243 = scalar_lea.vmem %s0, %s242
      %p244 = scmp.lt.s32.totalorder %s19, 1
      %s245 = scalar_select %p244, %s19, 1
      %s246 = scalar_lea.vmem %s6, %s245
      %v247 = vld [vmem:[%s243] sm:$0xff]
      %v248 = vld [vmem:[%s1] sm:$0xff]
      %v249 = vld [vmem:[%s1 + $0x8] sm:$0xff]
      %v250 = vld [vmem:[%s1 + $0x10] sm:$0xff]
      %v251 = vld [vmem:[%s1 + $0x18] sm:$0xff]
      %v252 = vld [vmem:[%s1 + $0x20] sm:$0xff]
      %v253 = vld [vmem:[%s1 + $0x28] sm:$0xff]
      %v254 = vld [vmem:[%s1 + $0x30] sm:$0xff]
      %v255 = vld [vmem:[%s1 + $0x38] sm:$0xff]
      %v256 = vld [vmem:[%s1 + $0x40] sm:$0x3]
      %v257 = vld [vmem:[%s1 + $0x48] sm:$0x3]
      %v258 = vld [vmem:[%s1 + $0x50] sm:$0x3]
      %v259 = vld [vmem:[%s1 + $0x58] sm:$0x3]
      %v260 = vld [vmem:[%s3] sm:$0xf]
      %v262 = vlaneseq
      %v263 = vshrl.u32 %v262, 7
      %v264 = vsub.s32 0, %v263
      %v265 = vrot.slane %v260, %v264
      %v266 = vlaneseq
      %v267 = vshrl.u32 %v266, 7
      %v268 = vsub.s32 1, %v267
      %v269 = vrot.slane %v260, %v268
      %v270 = vlaneseq
      %v271 = vshrl.u32 %v270, 7
      %v272 = vsub.s32 2, %v271
      %v273 = vrot.slane %v260, %v272
      %v274 = vlaneseq
      %v275 = vshrl.u32 %v274, 7
      %v276 = vsub.s32 3, %v275
      %v277 = vrot.slane %v260, %v276
      %vm282 = vcmask 146432
      %v284 = vsel %vm282, %v247, 0
      %vm286 = vcmask 1041408
      %v288 = vsel %vm286, %v256, 0
      %v291 = vsel %vm286, %v257, 0
      %v294 = vsel %vm286, %v258, 0
      %v297 = vsel %vm286, %v259, 0
      %299 = vmatprep.subr.mxu0 %v249
      %300 = vmatpush1.msra.mxu0 %v248
      %301 = vmatprep.subr.mxu0 %v253
      %302 = vmatpush1.msra.mxu0 %v252
      %303 = vmatprep.subr.mxu0 %v291
      %304 = vmatpush1.msra.mxu0 %v288
      %305 = vmatprep.subr.mxu0 0.0
      %306 = vmatpush1.msra.mxu0 0.0
      %307 = vmatprep.subr.mxu0 0.0
      %308 = vmatpush1.msra.mxu0 0.0
      %309 = vmatprep.subr.mxu0 0.0
      %310 = vmatpush1.msra.mxu0 0.0
      %311 = vmatprep.subr.mxu0 0.0
      %312 = vmatpush1.msra.mxu0 0.0
      %313 = vmatprep.subr.mxu0 0.0
      %314 = vmatpush1.msra.mxu0 0.0
      %315 = vmatprep.subr.mxu0 0.0
      %316 = vmatpush1.msra.mxu0 0.0
      %317 = vmatprep.subr.mxu0 0.0
      %318 = vmatpush1.msra.mxu0 0.0
      %319 = vmatprep.subr.mxu0 0.0
      %320 = vmatpush1.msra.mxu0 0.0
      %321 = vmatprep.subr.mxu0 0.0
      %322 = vmatpush1.msra.mxu0 0.0
      %323 = vmatprep.subr.mxu0 0.0
      %324 = vmatpush1.msra.mxu0 0.0
      %325 = vmatprep.subr.mxu0 0.0
      %326 = vmatpush1.msra.mxu0 0.0
      %327 = vmatprep.subr.mxu0 0.0
      %328 = vmatpush1.msra.mxu0 0.0
      %329 = vmatprep.subr.mxu0 0.0
      %330 = vmatpush1.msra.mxu0 0.0
      %331 = vmatprep.subr.mxu0 0.0
      %332 = vmatpush1.msra.mxu0 0.0
      %333 = vmatprep.subr.mxu0 0.0
      %334 = vmatpush1.msra.mxu0 0.0
      %335 = vmatprep.subr.mxu0 0.0
      %336 = vmatpush1.msra.mxu0 0.0
      %337 = vmatprep.subr.mxu0 0.0
      %338 = vmatpush1.msra.mxu0 0.0
      %339 = vmatprep.subr.mxu0 0.0
      %340 = vmatpush1.msra.mxu0 0.0
      %341 = vmatprep.subr.mxu0 0.0
      %342 = vmatpush1.msra.mxu0 0.0
      %343 = vmatprep.subr.mxu0 0.0
      %344 = vmatpush1.msra.mxu0 0.0
      %345 = vmatprep.subr.mxu0 0.0
      %346 = vmatpush1.msra.mxu0 0.0
      %347 = vmatprep.subr.mxu0 0.0
      %348 = vmatpush1.msra.mxu0 0.0
      %349 = vmatprep.subr.mxu0 0.0
      %350 = vmatpush1.msra.mxu0 0.0
      %351 = vmatprep.subr.mxu0 0.0
      %352 = vmatpush1.msra.mxu0 0.0
      %353 = vmatprep.subr.mxu0 0.0
      %354 = vmatpush1.msra.mxu0 0.0
      %355 = vmatprep.subr.mxu0 0.0
      %356 = vmatpush1.msra.mxu0 0.0
      %357 = vmatprep.subr.mxu0 0.0
      %358 = vmatpush1.msra.mxu0 0.0
      %359 = vmatprep.subr.mxu0 0.0
      %360 = vmatpush1.msra.mxu0 0.0
      %361 = vmatprep.subr.mxu0 0.0
      %362 = vmatpush1.msra.mxu0 0.0
      %363 = vmatprep.mubr.f32.mxu0 0.0
      %364 = vmatmul.mubr.f32.gmra.mrb[0].mxu0 %v284
      %v365 = vpop.f32.mrb[0].mxu0
      %v366 = vadd.f32 %v265, %v365
      %v367 = vpop.f32.mrb[0].mxu0
      %v368 = vadd.f32 %v269, %v367
      %369 = vdwg.mxu0
      %370 = vmatprep.subr.mxu0 %v251
      %371 = vmatpush1.msra.mxu0 %v250
      %372 = vmatprep.subr.mxu0 %v255
      %373 = vmatpush1.msra.mxu0 %v254
      %374 = vmatprep.subr.mxu0 %v297
      %375 = vmatpush1.msra.mxu0 %v294
      %376 = vmatprep.subr.mxu0 0.0
      %377 = vmatpush1.msra.mxu0 0.0
      %378 = vmatprep.subr.mxu0 0.0
      %379 = vmatpush1.msra.mxu0 0.0
      %380 = vmatprep.subr.mxu0 0.0
      %381 = vmatpush1.msra.mxu0 0.0
      %382 = vmatprep.subr.mxu0 0.0
      %383 = vmatpush1.msra.mxu0 0.0
      %384 = vmatprep.subr.mxu0 0.0
      %385 = vmatpush1.msra.mxu0 0.0
      %386 = vmatprep.subr.mxu0 0.0
      %387 = vmatpush1.msra.mxu0 0.0
      %388 = vmatprep.subr.mxu0 0.0
      %389 = vmatpush1.msra.mxu0 0.0
      %390 = vmatprep.subr.mxu0 0.0
      %391 = vmatpush1.msra.mxu0 0.0
      %392 = vmatprep.subr.mxu0 0.0
      %393 = vmatpush1.msra.mxu0 0.0
      %394 = vmatprep.subr.mxu0 0.0
      %395 = vmatpush1.msra.mxu0 0.0
      %396 = vmatprep.subr.mxu0 0.0
      %397 = vmatpush1.msra.mxu0 0.0
      %398 = vmatprep.subr.mxu0 0.0
      %399 = vmatpush1.msra.mxu0 0.0
      %400 = vmatprep.subr.mxu0 0.0
      %401 = vmatpush1.msra.mxu0 0.0
      %402 = vmatprep.subr.mxu0 0.0
      %403 = vmatpush1.msra.mxu0 0.0
      %404 = vmatprep.subr.mxu0 0.0
      %405 = vmatpush1.msra.mxu0 0.0
      %406 = vmatprep.subr.mxu0 0.0
      %407 = vmatpush1.msra.mxu0 0.0
      %408 = vmatprep.subr.mxu0 0.0
      %409 = vmatpush1.msra.mxu0 0.0
      %410 = vmatprep.subr.mxu0 0.0
      %411 = vmatpush1.msra.mxu0 0.0
      %412 = vmatprep.subr.mxu0 0.0
      %413 = vmatpush1.msra.mxu0 0.0
      %414 = vmatprep.subr.mxu0 0.0
      %415 = vmatpush1.msra.mxu0 0.0
      %416 = vmatprep.subr.mxu0 0.0
      %417 = vmatpush1.msra.mxu0 0.0
      %418 = vmatprep.subr.mxu0 0.0
      %419 = vmatpush1.msra.mxu0 0.0
      %420 = vmatprep.subr.mxu0 0.0
      %421 = vmatpush1.msra.mxu0 0.0
      %422 = vmatprep.subr.mxu0 0.0
      %423 = vmatpush1.msra.mxu0 0.0
      %424 = vmatprep.subr.mxu0 0.0
      %425 = vmatpush1.msra.mxu0 0.0
      %426 = vmatprep.subr.mxu0 0.0
      %427 = vmatpush1.msra.mxu0 0.0
      %428 = vmatprep.subr.mxu0 0.0
      %429 = vmatpush1.msra.mxu0 0.0
      %430 = vmatprep.subr.mxu0 0.0
      %431 = vmatpush1.msra.mxu0 0.0
      %432 = vmatprep.subr.mxu0 0.0
      %433 = vmatpush1.msra.mxu0 0.0
      %434 = vmatprep.mubr.f32.mxu0 0.0
      %435 = vmatmul.mubr.f32.gmra.mrb[0].mxu0 %v284
      %v436 = vpop.f32.mrb[0].mxu0
      %v437 = vadd.f32 %v273, %v436
      %v438 = vpop.f32.mrb[0].mxu0
      %v439 = vadd.f32 %v277, %v438
      %440 = vdwg.mxu0
      %v441 = vld [vmem:[%s2] sm:$0xff]
      %v442 = vld [vmem:[%s2 + $0x8] sm:$0xff]
      %v443 = vld [vmem:[%s2 + $0x10] sm:$0xff]
      %v444 = vld [vmem:[%s2 + $0x18] sm:$0xff]
      %v445 = vld [vmem:[%s2 + $0x20] sm:$0xff]
      %v446 = vld [vmem:[%s2 + $0x28] sm:$0xff]
      %v447 = vld [vmem:[%s2 + $0x30] sm:$0xff]
      %v448 = vld [vmem:[%s2 + $0x38] sm:$0xff]
      %v449 = vld [vmem:[%s2 + $0x40] sm:$0xff]
      %v450 = vld [vmem:[%s2 + $0x48] sm:$0xff]
      %v451 = vld [vmem:[%s2 + $0x50] sm:$0xff]
      %v452 = vld [vmem:[%s2 + $0x58] sm:$0xff]
      %v453 = vld [vmem:[%s2 + $0x60] sm:$0xff]
      %v454 = vld [vmem:[%s2 + $0x68] sm:$0xff]
      %v455 = vld [vmem:[%s2 + $0x70] sm:$0xff]
      %v456 = vld [vmem:[%s2 + $0x78] sm:$0xff]
      %v457 = vld [vmem:[%s2 + $0x80] sm:$0xff]
      %v458 = vld [vmem:[%s2 + $0x88] sm:$0xff]
      %v459 = vld [vmem:[%s2 + $0x90] sm:$0xff]
      %v460 = vld [vmem:[%s2 + $0x98] sm:$0xff]
      %v461 = vld [vmem:[%s2 + $0xa0] sm:$0xff]
      %v462 = vld [vmem:[%s2 + $0xa8] sm:$0xff]
      %v463 = vld [vmem:[%s2 + $0xb0] sm:$0xff]
      %v464 = vld [vmem:[%s2 + $0xb8] sm:$0xff]
      %v465 = vld [vmem:[%s2 + $0xc0] sm:$0xff]
      %v466 = vld [vmem:[%s2 + $0xc8] sm:$0xff]
      %v467 = vld [vmem:[%s2 + $0xd0] sm:$0xff]
      %v468 = vld [vmem:[%s2 + $0xd8] sm:$0xff]
      %v469 = vld [vmem:[%s2 + $0xe0] sm:$0xff]
      %v470 = vld [vmem:[%s2 + $0xe8] sm:$0xff]
      %v471 = vld [vmem:[%s2 + $0xf0] sm:$0xff]
      %v472 = vld [vmem:[%s2 + $0xf8] sm:$0xff]
      %v473 = vld [vmem:[%s2 + $0x100] sm:$0xff]
      %v474 = vld [vmem:[%s2 + $0x108] sm:$0xff]
      %v475 = vld [vmem:[%s2 + $0x110] sm:$0xff]
      %v476 = vld [vmem:[%s2 + $0x118] sm:$0xff]
      %v477 = vld [vmem:[%s2 + $0x120] sm:$0xff]
      %v478 = vld [vmem:[%s2 + $0x128] sm:$0xff]
      %v479 = vld [vmem:[%s2 + $0x130] sm:$0xff]
      %v480 = vld [vmem:[%s2 + $0x138] sm:$0xff]
      %v481 = vld [vmem:[%s2 + $0x140] sm:$0xff]
      %v482 = vld [vmem:[%s2 + $0x148] sm:$0xff]
      %v483 = vld [vmem:[%s2 + $0x150] sm:$0xff]
      %v484 = vld [vmem:[%s2 + $0x158] sm:$0xff]
      %v485 = vld [vmem:[%s2 + $0x160] sm:$0xff]
      %v486 = vld [vmem:[%s2 + $0x168] sm:$0xff]
      %v487 = vld [vmem:[%s2 + $0x170] sm:$0xff]
      %v488 = vld [vmem:[%s2 + $0x178] sm:$0xff]
      %v489 = vld [vmem:[%s2 + $0x180] sm:$0xff]
      %v490 = vld [vmem:[%s2 + $0x188] sm:$0xff]
      %v491 = vld [vmem:[%s2 + $0x190] sm:$0xff]
      %v492 = vld [vmem:[%s2 + $0x198] sm:$0xff]
      %v493 = vld [vmem:[%s2 + $0x1a0] sm:$0xff]
      %v494 = vld [vmem:[%s2 + $0x1a8] sm:$0xff]
      %v495 = vld [vmem:[%s2 + $0x1b0] sm:$0xff]
      %v496 = vld [vmem:[%s2 + $0x1b8] sm:$0xff]
      %v497 = vld [vmem:[%s2 + $0x1c0] sm:$0xff]
      %v498 = vld [vmem:[%s2 + $0x1c8] sm:$0xff]
      %v499 = vld [vmem:[%s2 + $0x1d0] sm:$0xff]
      %v500 = vld [vmem:[%s2 + $0x1d8] sm:$0xff]
      %v501 = vld [vmem:[%s2 + $0x1e0] sm:$0xff]
      %v502 = vld [vmem:[%s2 + $0x1e8] sm:$0xff]
      %v503 = vld [vmem:[%s2 + $0x1f0] sm:$0xff]
      %v504 = vld [vmem:[%s2 + $0x1f8] sm:$0xff]
      %505 = vmatprep.subr.mxu0 %v442
      %506 = vmatpush1.msra.mxu0 %v441
      %507 = vmatprep.subr.mxu0 %v446
      %508 = vmatpush1.msra.mxu0 %v445
      %509 = vmatprep.subr.mxu0 %v450
      %510 = vmatpush1.msra.mxu0 %v449
      %511 = vmatprep.subr.mxu0 %v454
      %512 = vmatpush1.msra.mxu0 %v453
      %513 = vmatprep.subr.mxu0 %v458
      %514 = vmatpush1.msra.mxu0 %v457
      %515 = vmatprep.subr.mxu0 %v462
      %516 = vmatpush1.msra.mxu0 %v461
      %517 = vmatprep.subr.mxu0 %v466
      %518 = vmatpush1.msra.mxu0 %v465
      %519 = vmatprep.subr.mxu0 %v470
      %520 = vmatpush1.msra.mxu0 %v469
      %521 = vmatprep.subr.mxu0 %v474
      %522 = vmatpush1.msra.mxu0 %v473
      %523 = vmatprep.subr.mxu0 %v478
      %524 = vmatpush1.msra.mxu0 %v477
      %525 = vmatprep.subr.mxu0 %v482
      %526 = vmatpush1.msra.mxu0 %v481
      %527 = vmatprep.subr.mxu0 %v486
      %528 = vmatpush1.msra.mxu0 %v485
      %529 = vmatprep.subr.mxu0 %v490
      %530 = vmatpush1.msra.mxu0 %v489
      %531 = vmatprep.subr.mxu0 %v494
      %532 = vmatpush1.msra.mxu0 %v493
      %533 = vmatprep.subr.mxu0 %v498
      %534 = vmatpush1.msra.mxu0 %v497
      %535 = vmatprep.subr.mxu0 %v502
      %536 = vmatpush1.msra.mxu0 %v501
      %537 = vmatprep.subr.mxu0 0.0
      %538 = vmatpush1.msra.mxu0 0.0
      %539 = vmatprep.subr.mxu0 0.0
      %540 = vmatpush1.msra.mxu0 0.0
      %541 = vmatprep.subr.mxu0 0.0
      %542 = vmatpush1.msra.mxu0 0.0
      %543 = vmatprep.subr.mxu0 0.0
      %544 = vmatpush1.msra.mxu0 0.0
      %545 = vmatprep.subr.mxu0 0.0
      %546 = vmatpush1.msra.mxu0 0.0
      %547 = vmatprep.subr.mxu0 0.0
      %548 = vmatpush1.msra.mxu0 0.0
      %549 = vmatprep.subr.mxu0 0.0
      %550 = vmatpush1.msra.mxu0 0.0
      %551 = vmatprep.subr.mxu0 0.0
      %552 = vmatpush1.msra.mxu0 0.0
      %553 = vmatprep.subr.mxu0 0.0
      %554 = vmatpush1.msra.mxu0 0.0
      %555 = vmatprep.subr.mxu0 0.0
      %556 = vmatpush1.msra.mxu0 0.0
      %557 = vmatprep.subr.mxu0 0.0
      %558 = vmatpush1.msra.mxu0 0.0
      %559 = vmatprep.subr.mxu0 0.0
      %560 = vmatpush1.msra.mxu0 0.0
      %561 = vmatprep.subr.mxu0 0.0
      %562 = vmatpush1.msra.mxu0 0.0
      %563 = vmatprep.subr.mxu0 0.0
      %564 = vmatpush1.msra.mxu0 0.0
      %565 = vmatprep.subr.mxu0 0.0
      %566 = vmatpush1.msra.mxu0 0.0
      %567 = vmatprep.subr.mxu0 0.0
      %568 = vmatpush1.msra.mxu0 0.0
      %569 = vmatprep.mubr.f32.mxu0 0.0
      %570 = vmatmul.mubr.f32.gmra.mrb[0].mxu0 0.0
      %v571 = vpop.f32.mrb[0].mxu0
      %v572 = vadd.f32 0.0, %v571
      %v573 = vpop.f32.mrb[0].mxu0
      %v574 = vadd.f32 0.0, %v573
      %575 = vdwg.mxu0
      %576 = vmatprep.subr.mxu0 %v444
      %577 = vmatpush1.msra.mxu0 %v443
      %578 = vmatprep.subr.mxu0 %v448
      %579 = vmatpush1.msra.mxu0 %v447
      %580 = vmatprep.subr.mxu0 %v452
      %581 = vmatpush1.msra.mxu0 %v451
      %582 = vmatprep.subr.mxu0 %v456
      %583 = vmatpush1.msra.mxu0 %v455
      %584 = vmatprep.subr.mxu0 %v460
      %585 = vmatpush1.msra.mxu0 %v459
      %586 = vmatprep.subr.mxu0 %v464
      %587 = vmatpush1.msra.mxu0 %v463
      %588 = vmatprep.subr.mxu0 %v468
      %589 = vmatpush1.msra.mxu0 %v467
      %590 = vmatprep.subr.mxu0 %v472
      %591 = vmatpush1.msra.mxu0 %v471
      %592 = vmatprep.subr.mxu0 %v476
      %593 = vmatpush1.msra.mxu0 %v475
      %594 = vmatprep.subr.mxu0 %v480
      %595 = vmatpush1.msra.mxu0 %v479
      %596 = vmatprep.subr.mxu0 %v484
      %597 = vmatpush1.msra.mxu0 %v483
      %598 = vmatprep.subr.mxu0 %v488
      %599 = vmatpush1.msra.mxu0 %v487
      %600 = vmatprep.subr.mxu0 %v492
      %601 = vmatpush1.msra.mxu0 %v491
      %602 = vmatprep.subr.mxu0 %v496
      %603 = vmatpush1.msra.mxu0 %v495
      %604 = vmatprep.subr.mxu0 %v500
      %605 = vmatpush1.msra.mxu0 %v499
      %606 = vmatprep.subr.mxu0 %v504
      %607 = vmatpush1.msra.mxu0 %v503
      %608 = vmatprep.subr.mxu0 0.0
      %609 = vmatpush1.msra.mxu0 0.0
      %610 = vmatprep.subr.mxu0 0.0
      %611 = vmatpush1.msra.mxu0 0.0
      %612 = vmatprep.subr.mxu0 0.0
      %613 = vmatpush1.msra.mxu0 0.0
      %614 = vmatprep.subr.mxu0 0.0
      %615 = vmatpush1.msra.mxu0 0.0
      %616 = vmatprep.subr.mxu0 0.0
      %617 = vmatpush1.msra.mxu0 0.0
      %618 = vmatprep.subr.mxu0 0.0
      %619 = vmatpush1.msra.mxu0 0.0
      %620 = vmatprep.subr.mxu0 0.0
      %621 = vmatpush1.msra.mxu0 0.0
      %622 = vmatprep.subr.mxu0 0.0
      %623 = vmatpush1.msra.mxu0 0.0
      %624 = vmatprep.subr.mxu0 0.0
      %625 = vmatpush1.msra.mxu0 0.0
      %626 = vmatprep.subr.mxu0 0.0
      %627 = vmatpush1.msra.mxu0 0.0
      %628 = vmatprep.subr.mxu0 0.0
      %629 = vmatpush1.msra.mxu0 0.0
      %630 = vmatprep.subr.mxu0 0.0
      %631 = vmatpush1.msra.mxu0 0.0
      %632 = vmatprep.subr.mxu0 0.0
      %633 = vmatpush1.msra.mxu0 0.0
      %634 = vmatprep.subr.mxu0 0.0
      %635 = vmatpush1.msra.mxu0 0.0
      %636 = vmatprep.subr.mxu0 0.0
      %637 = vmatpush1.msra.mxu0 0.0
      %638 = vmatprep.subr.mxu0 0.0
      %639 = vmatpush1.msra.mxu0 0.0
      %640 = vmatprep.mubr.f32.mxu0 0.0
      %641 = vmatmul.mubr.f32.gmra.mrb[0].mxu0 0.0
      %v642 = vpop.f32.mrb[0].mxu0
      %v643 = vadd.f32 0.0, %v642
      %v644 = vpop.f32.mrb[0].mxu0
      %v645 = vadd.f32 0.0, %v644
      %646 = vdwg.mxu0
      %v647 = vadd.f32 %v366, %v572
      %v648 = vadd.f32 %v368, %v574
      %v649 = vadd.f32 %v437, %v643
      %v650 = vadd.f32 %v439, %v645
      %v651 = vxor.u32 %v647, 2147483648
      %v652 = vxor.u32 %v648, 2147483648
      %v653 = vmul.f32 %v651, 1.442695
      %v654 = vpow.pop %v653
      %v655 = vmul.f32 %v652, 1.442695
      %v656 = vpow.pop %v655
      %v657 = vadd.f32 %v654, 1.0
      %v658 = vadd.f32 %v656, 1.0
      %v659 = vrcp.pop %v657
      %v660 = vmul.f32 1.0, %v659
      %v661 = vrcp.pop %v658
      %v662 = vmul.f32 1.0, %v661
      %v663 = vtanh.pop %v649
      %v664 = vmul.f32 %v662, 0.0
      %v665 = vmul.f32 %v660, %v663
      %v666 = vadd.f32 %v664, %v665
      %v667 = vxor.u32 %v650, 2147483648
      %v668 = vmul.f32 %v667, 1.442695
      %v669 = vpow.pop %v668
      %v670 = vadd.f32 %v669, 1.0
      %v671 = vrcp.pop %v670
      %v672 = vmul.f32 1.0, %v671
      %v673 = vtanh.pop %v666
      %v674 = vmul.f32 %v672, %v673
      %675 = vmatprep.subr.mxu0 %v442
      %676 = vmatpush1.msra.mxu0 %v441
      %677 = vmatprep.subr.mxu0 %v446
      %678 = vmatpush1.msra.mxu0 %v445
      %679 = vmatprep.subr.mxu0 %v450
      %680 = vmatpush1.msra.mxu0 %v449
      %681 = vmatprep.subr.mxu0 %v454
      %682 = vmatpush1.msra.mxu0 %v453
      %683 = vmatprep.subr.mxu0 %v458
      %684 = vmatpush1.msra.mxu0 %v457
      %685 = vmatprep.subr.mxu0 %v462
      %686 = vmatpush1.msra.mxu0 %v461
      %687 = vmatprep.subr.mxu0 %v466
      %688 = vmatpush1.msra.mxu0 %v465
      %689 = vmatprep.subr.mxu0 %v470
      %690 = vmatpush1.msra.mxu0 %v469
      %691 = vmatprep.subr.mxu0 %v474
      %692 = vmatpush1.msra.mxu0 %v473
      %693 = vmatprep.subr.mxu0 %v478
      %694 = vmatpush1.msra.mxu0 %v477
      %695 = vmatprep.subr.mxu0 %v482
      %696 = vmatpush1.msra.mxu0 %v481
      %697 = vmatprep.subr.mxu0 %v486
      %698 = vmatpush1.msra.mxu0 %v485
      %699 = vmatprep.subr.mxu0 %v490
      %700 = vmatpush1.msra.mxu0 %v489
      %701 = vmatprep.subr.mxu0 %v494
      %702 = vmatpush1.msra.mxu0 %v493
      %703 = vmatprep.subr.mxu0 %v498
      %704 = vmatpush1.msra.mxu0 %v497
      %705 = vmatprep.subr.mxu0 %v502
      %706 = vmatpush1.msra.mxu0 %v501
      %707 = vmatprep.subr.mxu0 0.0
      %708 = vmatpush1.msra.mxu0 0.0
      %709 = vmatprep.subr.mxu0 0.0
      %710 = vmatpush1.msra.mxu0 0.0
      %711 = vmatprep.subr.mxu0 0.0
      %712 = vmatpush1.msra.mxu0 0.0
      %713 = vmatprep.subr.mxu0 0.0
      %714 = vmatpush1.msra.mxu0 0.0
      %715 = vmatprep.subr.mxu0 0.0
      %716 = vmatpush1.msra.mxu0 0.0
      %717 = vmatprep.subr.mxu0 0.0
      %718 = vmatpush1.msra.mxu0 0.0
      %719 = vmatprep.subr.mxu0 0.0
      %720 = vmatpush1.msra.mxu0 0.0
      %721 = vmatprep.subr.mxu0 0.0
      %722 = vmatpush1.msra.mxu0 0.0
      %723 = vmatprep.subr.mxu0 0.0
      %724 = vmatpush1.msra.mxu0 0.0
      %725 = vmatprep.subr.mxu0 0.0
      %726 = vmatpush1.msra.mxu0 0.0
      %727 = vmatprep.subr.mxu0 0.0
      %728 = vmatpush1.msra.mxu0 0.0
      %729 = vmatprep.subr.mxu0 0.0
      %730 = vmatpush1.msra.mxu0 0.0
      %731 = vmatprep.subr.mxu0 0.0
      %732 = vmatpush1.msra.mxu0 0.0
      %733 = vmatprep.subr.mxu0 0.0
      %734 = vmatpush1.msra.mxu0 0.0
      %735 = vmatprep.subr.mxu0 0.0
      %736 = vmatpush1.msra.mxu0 0.0
      %737 = vmatprep.subr.mxu0 0.0
      %738 = vmatpush1.msra.mxu0 0.0
      %739 = vmatprep.mubr.f32.mxu0 0.0
      %740 = vmatmul.mubr.f32.gmra.mrb[0].mxu0 %v674
      %v741 = vpop.f32.mrb[0].mxu0
      %v742 = vadd.f32 0.0, %v741
      %v743 = vpop.f32.mrb[0].mxu0
      %v744 = vadd.f32 0.0, %v743
      %745 = vdwg.mxu0
      %746 = vmatprep.subr.mxu0 %v444
      %747 = vmatpush1.msra.mxu0 %v443
      %748 = vmatprep.subr.mxu0 %v448
      %749 = vmatpush1.msra.mxu0 %v447
      %750 = vmatprep.subr.mxu0 %v452
      %751 = vmatpush1.msra.mxu0 %v451
      %752 = vmatprep.subr.mxu0 %v456
      %753 = vmatpush1.msra.mxu0 %v455
      %754 = vmatprep.subr.mxu0 %v460
      %755 = vmatpush1.msra.mxu0 %v459
      %756 = vmatprep.subr.mxu0 %v464
      %757 = vmatpush1.msra.mxu0 %v463
      %758 = vmatprep.subr.mxu0 %v468
      %759 = vmatpush1.msra.mxu0 %v467
      %760 = vmatprep.subr.mxu0 %v472
      %761 = vmatpush1.msra.mxu0 %v471
      %762 = vmatprep.subr.mxu0 %v476
      %763 = vmatpush1.msra.mxu0 %v475
      %764 = vmatprep.subr.mxu0 %v480
      %765 = vmatpush1.msra.mxu0 %v479
      %766 = vmatprep.subr.mxu0 %v484
      %767 = vmatpush1.msra.mxu0 %v483
      %768 = vmatprep.subr.mxu0 %v488
      %769 = vmatpush1.msra.mxu0 %v487
      %770 = vmatprep.subr.mxu0 %v492
      %771 = vmatpush1.msra.mxu0 %v491
      %772 = vmatprep.subr.mxu0 %v496
      %773 = vmatpush1.msra.mxu0 %v495
      %774 = vmatprep.subr.mxu0 %v500
      %775 = vmatpush1.msra.mxu0 %v499
      %776 = vmatprep.subr.mxu0 %v504
      %777 = vmatpush1.msra.mxu0 %v503
      %778 = vmatprep.subr.mxu0 0.0
      %779 = vmatpush1.msra.mxu0 0.0
      %780 = vmatprep.subr.mxu0 0.0
      %781 = vmatpush1.msra.mxu0 0.0
      %782 = vmatprep.subr.mxu0 0.0
      %783 = vmatpush1.msra.mxu0 0.0
      %784 = vmatprep.subr.mxu0 0.0
      %785 = vmatpush1.msra.mxu0 0.0
      %786 = vmatprep.subr.mxu0 0.0
      %787 = vmatpush1.msra.mxu0 0.0
      %788 = vmatprep.subr.mxu0 0.0
      %789 = vmatpush1.msra.mxu0 0.0
      %790 = vmatprep.subr.mxu0 0.0
      %791 = vmatpush1.msra.mxu0 0.0
      %792 = vmatprep.subr.mxu0 0.0
      %793 = vmatpush1.msra.mxu0 0.0
      %794 = vmatprep.subr.mxu0 0.0
      %795 = vmatpush1.msra.mxu0 0.0
      %796 = vmatprep.subr.mxu0 0.0
      %797 = vmatpush1.msra.mxu0 0.0
      %798 = vmatprep.subr.mxu0 0.0
      %799 = vmatpush1.msra.mxu0 0.0
      %800 = vmatprep.subr.mxu0 0.0
      %801 = vmatpush1.msra.mxu0 0.0
      %802 = vmatprep.subr.mxu0 0.0
      %803 = vmatpush1.msra.mxu0 0.0
      %804 = vmatprep.subr.mxu0 0.0
      %805 = vmatpush1.msra.mxu0 0.0
      %806 = vmatprep.subr.mxu0 0.0
      %807 = vmatpush1.msra.mxu0 0.0
      %808 = vmatprep.subr.mxu0 0.0
      %809 = vmatpush1.msra.mxu0 0.0
      %810 = vmatprep.mubr.f32.mxu0 0.0
      %811 = vmatmul.mubr.f32.gmra.mrb[0].mxu0 %v674
      %v812 = vpop.f32.mrb[0].mxu0
      %v813 = vadd.f32 0.0, %v812
      %v814 = vpop.f32.mrb[0].mxu0
      %v815 = vadd.f32 0.0, %v814
      %816 = vdwg.mxu0
      %v821 = vrot.slane %v742, 7
      %v822 = vrot.slane %v744, 7
      %v823 = vrot.slane %v813, 7
      %v824 = vrot.slane %v815, 7
      %v829 = vadd.f32 %v366, %v821
      %v830 = vadd.f32 %v368, %v822
      %v831 = vadd.f32 %v437, %v823
      %v832 = vadd.f32 %v439, %v824
      %v833 = vxor.u32 %v829, 2147483648
      %v834 = vxor.u32 %v830, 2147483648
      %v835 = vmul.f32 %v833, 1.442695
      %v836 = vpow.pop %v835
      %v837 = vmul.f32 %v834, 1.442695
      %v838 = vpow.pop %v837
      %v839 = vadd.f32 %v836, 1.0
      %v840 = vadd.f32 %v838, 1.0
      %v841 = vrcp.pop %v839
      %v842 = vmul.f32 1.0, %v841
      %v843 = vrcp.pop %v840
      %v844 = vmul.f32 1.0, %v843
      %v845 = vtanh.pop %v831
      %v847 = vrot.slane %v666, 7
      %v849 = vmul.f32 %v844, %v847
      %v850 = vmul.f32 %v842, %v845
      %v851 = vadd.f32 %v849, %v850
      %v852 = vxor.u32 %v832, 2147483648
      %v853 = vmul.f32 %v852, 1.442695
      %v854 = vpow.pop %v853
      %v855 = vadd.f32 %v854, 1.0
      %v856 = vrcp.pop %v855
      %v857 = vmul.f32 1.0, %v856
      %v858 = vtanh.pop %v851
      %v859 = vmul.f32 %v857, %v858
      %v861 = vrot.slane %v859, 1
      %863 = vmatprep.subr.mxu0 %v442
      %864 = vmatpush1.msra.mxu0 %v441
      %865 = vmatprep.subr.mxu0 %v446
      %866 = vmatpush1.msra.mxu0 %v445
      %867 = vmatprep.subr.mxu0 %v450
      %868 = vmatpush1.msra.mxu0 %v449
      %869 = vmatprep.subr.mxu0 %v454
      %870 = vmatpush1.msra.mxu0 %v453
      %871 = vmatprep.subr.mxu0 %v458
      %872 = vmatpush1.msra.mxu0 %v457
      %873 = vmatprep.subr.mxu0 %v462
      %874 = vmatpush1.msra.mxu0 %v461
      %875 = vmatprep.subr.mxu0 %v466
      %876 = vmatpush1.msra.mxu0 %v465
      %877 = vmatprep.subr.mxu0 %v470
      %878 = vmatpush1.msra.mxu0 %v469
      %879 = vmatprep.subr.mxu0 %v474
      %880 = vmatpush1.msra.mxu0 %v473
      %881 = vmatprep.subr.mxu0 %v478
      %882 = vmatpush1.msra.mxu0 %v477
      %883 = vmatprep.subr.mxu0 %v482
      %884 = vmatpush1.msra.mxu0 %v481
      %885 = vmatprep.subr.mxu0 %v486
      %886 = vmatpush1.msra.mxu0 %v485
      %887 = vmatprep.subr.mxu0 %v490
      %888 = vmatpush1.msra.mxu0 %v489
      %889 = vmatprep.subr.mxu0 %v494
      %890 = vmatpush1.msra.mxu0 %v493
      %891 = vmatprep.subr.mxu0 %v498
      %892 = vmatpush1.msra.mxu0 %v497
      %893 = vmatprep.subr.mxu0 %v502
      %894 = vmatpush1.msra.mxu0 %v501
      %895 = vmatprep.subr.mxu0 0.0
      %896 = vmatpush1.msra.mxu0 0.0
      %897 = vmatprep.subr.mxu0 0.0
      %898 = vmatpush1.msra.mxu0 0.0
      %899 = vmatprep.subr.mxu0 0.0
      %900 = vmatpush1.msra.mxu0 0.0
      %901 = vmatprep.subr.mxu0 0.0
      %902 = vmatpush1.msra.mxu0 0.0
      %903 = vmatprep.subr.mxu0 0.0
      %904 = vmatpush1.msra.mxu0 0.0
      %905 = vmatprep.subr.mxu0 0.0
      %906 = vmatpush1.msra.mxu0 0.0
      %907 = vmatprep.subr.mxu0 0.0
      %908 = vmatpush1.msra.mxu0 0.0
      %909 = vmatprep.subr.mxu0 0.0
      %910 = vmatpush1.msra.mxu0 0.0
      %911 = vmatprep.subr.mxu0 0.0
      %912 = vmatpush1.msra.mxu0 0.0
      %913 = vmatprep.subr.mxu0 0.0
      %914 = vmatpush1.msra.mxu0 0.0
      %915 = vmatprep.subr.mxu0 0.0
      %916 = vmatpush1.msra.mxu0 0.0
      %917 = vmatprep.subr.mxu0 0.0
      %918 = vmatpush1.msra.mxu0 0.0
      %919 = vmatprep.subr.mxu0 0.0
      %920 = vmatpush1.msra.mxu0 0.0
      %921 = vmatprep.subr.mxu0 0.0
      %922 = vmatpush1.msra.mxu0 0.0
      %923 = vmatprep.subr.mxu0 0.0
      %924 = vmatpush1.msra.mxu0 0.0
      %925 = vmatprep.subr.mxu0 0.0
      %926 = vmatpush1.msra.mxu0 0.0
      %927 = vmatprep.mubr.f32.mxu0 0.0
      %928 = vmatmul.mubr.f32.gmra.mrb[0].mxu0 %v861
      %v929 = vpop.f32.mrb[0].mxu0
      %v930 = vadd.f32 0.0, %v929
      %v931 = vpop.f32.mrb[0].mxu0
      %v932 = vadd.f32 0.0, %v931
      %933 = vdwg.mxu0
      %934 = vmatprep.subr.mxu0 %v444
      %935 = vmatpush1.msra.mxu0 %v443
      %936 = vmatprep.subr.mxu0 %v448
      %937 = vmatpush1.msra.mxu0 %v447
      %938 = vmatprep.subr.mxu0 %v452
      %939 = vmatpush1.msra.mxu0 %v451
      %940 = vmatprep.subr.mxu0 %v456
      %941 = vmatpush1.msra.mxu0 %v455
      %942 = vmatprep.subr.mxu0 %v460
      %943 = vmatpush1.msra.mxu0 %v459
      %944 = vmatprep.subr.mxu0 %v464
      %945 = vmatpush1.msra.mxu0 %v463
      %946 = vmatprep.subr.mxu0 %v468
      %947 = vmatpush1.msra.mxu0 %v467
      %948 = vmatprep.subr.mxu0 %v472
      %949 = vmatpush1.msra.mxu0 %v471
      %950 = vmatprep.subr.mxu0 %v476
      %951 = vmatpush1.msra.mxu0 %v475
      %952 = vmatprep.subr.mxu0 %v480
      %953 = vmatpush1.msra.mxu0 %v479
      %954 = vmatprep.subr.mxu0 %v484
      %955 = vmatpush1.msra.mxu0 %v483
      %956 = vmatprep.subr.mxu0 %v488
      %957 = vmatpush1.msra.mxu0 %v487
      %958 = vmatprep.subr.mxu0 %v492
      %959 = vmatpush1.msra.mxu0 %v491
      %960 = vmatprep.subr.mxu0 %v496
      %961 = vmatpush1.msra.mxu0 %v495
      %962 = vmatprep.subr.mxu0 %v500
      %963 = vmatpush1.msra.mxu0 %v499
      %964 = vmatprep.subr.mxu0 %v504
      %965 = vmatpush1.msra.mxu0 %v503
      %966 = vmatprep.subr.mxu0 0.0
      %967 = vmatpush1.msra.mxu0 0.0
      %968 = vmatprep.subr.mxu0 0.0
      %969 = vmatpush1.msra.mxu0 0.0
      %970 = vmatprep.subr.mxu0 0.0
      %971 = vmatpush1.msra.mxu0 0.0
      %972 = vmatprep.subr.mxu0 0.0
      %973 = vmatpush1.msra.mxu0 0.0
      %974 = vmatprep.subr.mxu0 0.0
      %975 = vmatpush1.msra.mxu0 0.0
      %976 = vmatprep.subr.mxu0 0.0
      %977 = vmatpush1.msra.mxu0 0.0
      %978 = vmatprep.subr.mxu0 0.0
      %979 = vmatpush1.msra.mxu0 0.0
      %980 = vmatprep.subr.mxu0 0.0
      %981 = vmatpush1.msra.mxu0 0.0
      %982 = vmatprep.subr.mxu0 0.0
      %983 = vmatpush1.msra.mxu0 0.0
      %984 = vmatprep.subr.mxu0 0.0
      %985 = vmatpush1.msra.mxu0 0.0
      %986 = vmatprep.subr.mxu0 0.0
      %987 = vmatpush1.msra.mxu0 0.0
      %988 = vmatprep.subr.mxu0 0.0
      %989 = vmatpush1.msra.mxu0 0.0
      %990 = vmatprep.subr.mxu0 0.0
      %991 = vmatpush1.msra.mxu0 0.0
      %992 = vmatprep.subr.mxu0 0.0
      %993 = vmatpush1.msra.mxu0 0.0
      %994 = vmatprep.subr.mxu0 0.0
      %995 = vmatpush1.msra.mxu0 0.0
      %996 = vmatprep.subr.mxu0 0.0
      %997 = vmatpush1.msra.mxu0 0.0
      %998 = vmatprep.mubr.f32.mxu0 0.0
      %999 = vmatmul.mubr.f32.gmra.mrb[0].mxu0 %v861
      %v1000 = vpop.f32.mrb[0].mxu0
      %v1001 = vadd.f32 0.0, %v1000
      %v1002 = vpop.f32.mrb[0].mxu0
      %v1003 = vadd.f32 0.0, %v1002
      %1004 = vdwg.mxu0
      %v1009 = vrot.slane %v930, 6
      %v1010 = vrot.slane %v932, 6
      %v1011 = vrot.slane %v1001, 6
      %v1012 = vrot.slane %v1003, 6
      %v1017 = vadd.f32 %v366, %v1009
      %v1018 = vadd.f32 %v368, %v1010
      %v1019 = vadd.f32 %v437, %v1011
      %v1020 = vadd.f32 %v439, %v1012
      %v1021 = vxor.u32 %v1017, 2147483648
      %v1022 = vxor.u32 %v1018, 2147483648
      %v1023 = vmul.f32 %v1021, 1.442695
      %v1024 = vpow.pop %v1023
      %v1025 = vmul.f32 %v1022, 1.442695
      %v1026 = vpow.pop %v1025
      %v1027 = vadd.f32 %v1024, 1.0
      %v1028 = vadd.f32 %v1026, 1.0
      %v1029 = vrcp.pop %v1027
      %v1030 = vmul.f32 1.0, %v1029
      %v1031 = vrcp.pop %v1028
      %v1032 = vmul.f32 1.0, %v1031
      %v1033 = vtanh.pop %v1019
      %v1035 = vrot.slane %v851, 7
      %v1037 = vmul.f32 %v1032, %v1035
      %v1038 = vmul.f32 %v1030, %v1033
      %v1039 = vadd.f32 %v1037, %v1038
      %v1040 = vxor.u32 %v1020, 2147483648
      %v1041 = vmul.f32 %v1040, 1.442695
      %v1042 = vpow.pop %v1041
      %v1043 = vadd.f32 %v1042, 1.0
      %v1044 = vrcp.pop %v1043
      %v1045 = vmul.f32 1.0, %v1044
      %v1046 = vtanh.pop %v1039
      %v1047 = vmul.f32 %v1045, %v1046
      %v1049 = vrot.slane %v1047, 2
      %1051 = vmatprep.subr.mxu0 %v442
      %1052 = vmatpush1.msra.mxu0 %v441
      %1053 = vmatprep.subr.mxu0 %v446
      %1054 = vmatpush1.msra.mxu0 %v445
      %1055 = vmatprep.subr.mxu0 %v450
      %1056 = vmatpush1.msra.mxu0 %v449
      %1057 = vmatprep.subr.mxu0 %v454
      %1058 = vmatpush1.msra.mxu0 %v453
      %1059 = vmatprep.subr.mxu0 %v458
      %1060 = vmatpush1.msra.mxu0 %v457
      %1061 = vmatprep.subr.mxu0 %v462
      %1062 = vmatpush1.msra.mxu0 %v461
      %1063 = vmatprep.subr.mxu0 %v466
      %1064 = vmatpush1.msra.mxu0 %v465
      %1065 = vmatprep.subr.mxu0 %v470
      %1066 = vmatpush1.msra.mxu0 %v469
      %1067 = vmatprep.subr.mxu0 %v474
      %1068 = vmatpush1.msra.mxu0 %v473
      %1069 = vmatprep.subr.mxu0 %v478
      %1070 = vmatpush1.msra.mxu0 %v477
      %1071 = vmatprep.subr.mxu0 %v482
      %1072 = vmatpush1.msra.mxu0 %v481
      %1073 = vmatprep.subr.mxu0 %v486
      %1074 = vmatpush1.msra.mxu0 %v485
      %1075 = vmatprep.subr.mxu0 %v490
      %1076 = vmatpush1.msra.mxu0 %v489
      %1077 = vmatprep.subr.mxu0 %v494
      %1078 = vmatpush1.msra.mxu0 %v493
      %1079 = vmatprep.subr.mxu0 %v498
      %1080 = vmatpush1.msra.mxu0 %v497
      %1081 = vmatprep.subr.mxu0 %v502
      %1082 = vmatpush1.msra.mxu0 %v501
      %1083 = vmatprep.subr.mxu0 0.0
      %1084 = vmatpush1.msra.mxu0 0.0
      %1085 = vmatprep.subr.mxu0 0.0
      %1086 = vmatpush1.msra.mxu0 0.0
      %1087 = vmatprep.subr.mxu0 0.0
      %1088 = vmatpush1.msra.mxu0 0.0
      %1089 = vmatprep.subr.mxu0 0.0
      %1090 = vmatpush1.msra.mxu0 0.0
      %1091 = vmatprep.subr.mxu0 0.0
      %1092 = vmatpush1.msra.mxu0 0.0
      %1093 = vmatprep.subr.mxu0 0.0
      %1094 = vmatpush1.msra.mxu0 0.0
      %1095 = vmatprep.subr.mxu0 0.0
      %1096 = vmatpush1.msra.mxu0 0.0
      %1097 = vmatprep.subr.mxu0 0.0
      %1098 = vmatpush1.msra.mxu0 0.0
      %1099 = vmatprep.subr.mxu0 0.0
      %1100 = vmatpush1.msra.mxu0 0.0
      %1101 = vmatprep.subr.mxu0 0.0
      %1102 = vmatpush1.msra.mxu0 0.0
      %1103 = vmatprep.subr.mxu0 0.0
      %1104 = vmatpush1.msra.mxu0 0.0
      %1105 = vmatprep.subr.mxu0 0.0
      %1106 = vmatpush1.msra.mxu0 0.0
      %1107 = vmatprep.subr.mxu0 0.0
      %1108 = vmatpush1.msra.mxu0 0.0
      %1109 = vmatprep.subr.mxu0 0.0
      %1110 = vmatpush1.msra.mxu0 0.0
      %1111 = vmatprep.subr.mxu0 0.0
      %1112 = vmatpush1.msra.mxu0 0.0
      %1113 = vmatprep.subr.mxu0 0.0
      %1114 = vmatpush1.msra.mxu0 0.0
      %1115 = vmatprep.mubr.f32.mxu0 0.0
      %1116 = vmatmul.mubr.f32.gmra.mrb[0].mxu0 %v1049
      %v1117 = vpop.f32.mrb[0].mxu0
      %v1118 = vadd.f32 0.0, %v1117
      %v1119 = vpop.f32.mrb[0].mxu0
      %v1120 = vadd.f32 0.0, %v1119
      %1121 = vdwg.mxu0
      %1122 = vmatprep.subr.mxu0 %v444
      %1123 = vmatpush1.msra.mxu0 %v443
      %1124 = vmatprep.subr.mxu0 %v448
      %1125 = vmatpush1.msra.mxu0 %v447
      %1126 = vmatprep.subr.mxu0 %v452
      %1127 = vmatpush1.msra.mxu0 %v451
      %1128 = vmatprep.subr.mxu0 %v456
      %1129 = vmatpush1.msra.mxu0 %v455
      %1130 = vmatprep.subr.mxu0 %v460
      %1131 = vmatpush1.msra.mxu0 %v459
      %1132 = vmatprep.subr.mxu0 %v464
      %1133 = vmatpush1.msra.mxu0 %v463
      %1134 = vmatprep.subr.mxu0 %v468
      %1135 = vmatpush1.msra.mxu0 %v467
      %1136 = vmatprep.subr.mxu0 %v472
      %1137 = vmatpush1.msra.mxu0 %v471
      %1138 = vmatprep.subr.mxu0 %v476
      %1139 = vmatpush1.msra.mxu0 %v475
      %1140 = vmatprep.subr.mxu0 %v480
      %1141 = vmatpush1.msra.mxu0 %v479
      %1142 = vmatprep.subr.mxu0 %v484
      %1143 = vmatpush1.msra.mxu0 %v483
      %1144 = vmatprep.subr.mxu0 %v488
      %1145 = vmatpush1.msra.mxu0 %v487
      %1146 = vmatprep.subr.mxu0 %v492
      %1147 = vmatpush1.msra.mxu0 %v491
      %1148 = vmatprep.subr.mxu0 %v496
      %1149 = vmatpush1.msra.mxu0 %v495
      %1150 = vmatprep.subr.mxu0 %v500
      %1151 = vmatpush1.msra.mxu0 %v499
      %1152 = vmatprep.subr.mxu0 %v504
      %1153 = vmatpush1.msra.mxu0 %v503
      %1154 = vmatprep.subr.mxu0 0.0
      %1155 = vmatpush1.msra.mxu0 0.0
      %1156 = vmatprep.subr.mxu0 0.0
      %1157 = vmatpush1.msra.mxu0 0.0
      %1158 = vmatprep.subr.mxu0 0.0
      %1159 = vmatpush1.msra.mxu0 0.0
      %1160 = vmatprep.subr.mxu0 0.0
      %1161 = vmatpush1.msra.mxu0 0.0
      %1162 = vmatprep.subr.mxu0 0.0
      %1163 = vmatpush1.msra.mxu0 0.0
      %1164 = vmatprep.subr.mxu0 0.0
      %1165 = vmatpush1.msra.mxu0 0.0
      %1166 = vmatprep.subr.mxu0 0.0
      %1167 = vmatpush1.msra.mxu0 0.0
      %1168 = vmatprep.subr.mxu0 0.0
      %1169 = vmatpush1.msra.mxu0 0.0
      %1170 = vmatprep.subr.mxu0 0.0
      %1171 = vmatpush1.msra.mxu0 0.0
      %1172 = vmatprep.subr.mxu0 0.0
      %1173 = vmatpush1.msra.mxu0 0.0
      %1174 = vmatprep.subr.mxu0 0.0
      %1175 = vmatpush1.msra.mxu0 0.0
      %1176 = vmatprep.subr.mxu0 0.0
      %1177 = vmatpush1.msra.mxu0 0.0
      %1178 = vmatprep.subr.mxu0 0.0
      %1179 = vmatpush1.msra.mxu0 0.0
      %1180 = vmatprep.subr.mxu0 0.0
      %1181 = vmatpush1.msra.mxu0 0.0
      %1182 = vmatprep.subr.mxu0 0.0
      %1183 = vmatpush1.msra.mxu0 0.0
      %1184 = vmatprep.subr.mxu0 0.0
      %1185 = vmatpush1.msra.mxu0 0.0
      %1186 = vmatprep.mubr.f32.mxu0 0.0
      %1187 = vmatmul.mubr.f32.gmra.mrb[0].mxu0 %v1049
      %v1188 = vpop.f32.mrb[0].mxu0
      %v1189 = vadd.f32 0.0, %v1188
      %v1190 = vpop.f32.mrb[0].mxu0
      %v1191 = vadd.f32 0.0, %v1190
      %1192 = vdwg.mxu0
      %v1197 = vrot.slane %v1118, 5
      %v1198 = vrot.slane %v1120, 5
      %v1199 = vrot.slane %v1189, 5
      %v1200 = vrot.slane %v1191, 5
      %v1205 = vadd.f32 %v366, %v1197
      %v1206 = vadd.f32 %v368, %v1198
      %v1207 = vadd.f32 %v437, %v1199
      %v1208 = vadd.f32 %v439, %v1200
      %v1209 = vxor.u32 %v1205, 2147483648
      %v1210 = vxor.u32 %v1206, 2147483648
      %v1211 = vmul.f32 %v1209, 1.442695
      %v1212 = vpow.pop %v1211
      %v1213 = vmul.f32 %v1210, 1.442695
      %v1214 = vpow.pop %v1213
      %v1215 = vadd.f32 %v1212, 1.0
      %v1216 = vadd.f32 %v1214, 1.0
      %v1217 = vrcp.pop %v1215
      %v1218 = vmul.f32 1.0, %v1217
      %v1219 = vrcp.pop %v1216
      %v1220 = vmul.f32 1.0, %v1219
      %v1221 = vtanh.pop %v1207
      %v1223 = vrot.slane %v1039, 7
      %v1225 = vmul.f32 %v1220, %v1223
      %v1226 = vmul.f32 %v1218, %v1221
      %v1227 = vadd.f32 %v1225, %v1226
      %v1228 = vxor.u32 %v1208, 2147483648
      %v1229 = vmul.f32 %v1228, 1.442695
      %v1230 = vpow.pop %v1229
      %v1231 = vadd.f32 %v1230, 1.0
      %v1232 = vrcp.pop %v1231
      %v1233 = vmul.f32 1.0, %v1232
      %v1234 = vtanh.pop %v1227
      %v1235 = vmul.f32 %v1233, %v1234
      %v1237 = vrot.slane %v1235, 3
      %1239 = vmatprep.subr.mxu0 %v442
      %1240 = vmatpush1.msra.mxu0 %v441
      %1241 = vmatprep.subr.mxu0 %v446
      %1242 = vmatpush1.msra.mxu0 %v445
      %1243 = vmatprep.subr.mxu0 %v450
      %1244 = vmatpush1.msra.mxu0 %v449
      %1245 = vmatprep.subr.mxu0 %v454
      %1246 = vmatpush1.msra.mxu0 %v453
      %1247 = vmatprep.subr.mxu0 %v458
      %1248 = vmatpush1.msra.mxu0 %v457
      %1249 = vmatprep.subr.mxu0 %v462
      %1250 = vmatpush1.msra.mxu0 %v461
      %1251 = vmatprep.subr.mxu0 %v466
      %1252 = vmatpush1.msra.mxu0 %v465
      %1253 = vmatprep.subr.mxu0 %v470
      %1254 = vmatpush1.msra.mxu0 %v469
      %1255 = vmatprep.subr.mxu0 %v474
      %1256 = vmatpush1.msra.mxu0 %v473
      %1257 = vmatprep.subr.mxu0 %v478
      %1258 = vmatpush1.msra.mxu0 %v477
      %1259 = vmatprep.subr.mxu0 %v482
      %1260 = vmatpush1.msra.mxu0 %v481
      %1261 = vmatprep.subr.mxu0 %v486
      %1262 = vmatpush1.msra.mxu0 %v485
      %1263 = vmatprep.subr.mxu0 %v490
      %1264 = vmatpush1.msra.mxu0 %v489
      %1265 = vmatprep.subr.mxu0 %v494
      %1266 = vmatpush1.msra.mxu0 %v493
      %1267 = vmatprep.subr.mxu0 %v498
      %1268 = vmatpush1.msra.mxu0 %v497
      %1269 = vmatprep.subr.mxu0 %v502
      %1270 = vmatpush1.msra.mxu0 %v501
      %1271 = vmatprep.subr.mxu0 0.0
      %1272 = vmatpush1.msra.mxu0 0.0
      %1273 = vmatprep.subr.mxu0 0.0
      %1274 = vmatpush1.msra.mxu0 0.0
      %1275 = vmatprep.subr.mxu0 0.0
      %1276 = vmatpush1.msra.mxu0 0.0
      %1277 = vmatprep.subr.mxu0 0.0
      %1278 = vmatpush1.msra.mxu0 0.0
      %1279 = vmatprep.subr.mxu0 0.0
      %1280 = vmatpush1.msra.mxu0 0.0
      %1281 = vmatprep.subr.mxu0 0.0
      %1282 = vmatpush1.msra.mxu0 0.0
      %1283 = vmatprep.subr.mxu0 0.0
      %1284 = vmatpush1.msra.mxu0 0.0
      %1285 = vmatprep.subr.mxu0 0.0
      %1286 = vmatpush1.msra.mxu0 0.0
      %1287 = vmatprep.subr.mxu0 0.0
      %1288 = vmatpush1.msra.mxu0 0.0
      %1289 = vmatprep.subr.mxu0 0.0
      %1290 = vmatpush1.msra.mxu0 0.0
      %1291 = vmatprep.subr.mxu0 0.0
      %1292 = vmatpush1.msra.mxu0 0.0
      %1293 = vmatprep.subr.mxu0 0.0
      %1294 = vmatpush1.msra.mxu0 0.0
      %1295 = vmatprep.subr.mxu0 0.0
      %1296 = vmatpush1.msra.mxu0 0.0
      %1297 = vmatprep.subr.mxu0 0.0
      %1298 = vmatpush1.msra.mxu0 0.0
      %1299 = vmatprep.subr.mxu0 0.0
      %1300 = vmatpush1.msra.mxu0 0.0
      %1301 = vmatprep.subr.mxu0 0.0
      %1302 = vmatpush1.msra.mxu0 0.0
      %1303 = vmatprep.mubr.f32.mxu0 0.0
      %1304 = vmatmul.mubr.f32.gmra.mrb[0].mxu0 %v1237
      %v1305 = vpop.f32.mrb[0].mxu0
      %v1306 = vadd.f32 0.0, %v1305
      %v1307 = vpop.f32.mrb[0].mxu0
      %v1308 = vadd.f32 0.0, %v1307
      %1309 = vdwg.mxu0
      %1310 = vmatprep.subr.mxu0 %v444
      %1311 = vmatpush1.msra.mxu0 %v443
      %1312 = vmatprep.subr.mxu0 %v448
      %1313 = vmatpush1.msra.mxu0 %v447
      %1314 = vmatprep.subr.mxu0 %v452
      %1315 = vmatpush1.msra.mxu0 %v451
      %1316 = vmatprep.subr.mxu0 %v456
      %1317 = vmatpush1.msra.mxu0 %v455
      %1318 = vmatprep.subr.mxu0 %v460
      %1319 = vmatpush1.msra.mxu0 %v459
      %1320 = vmatprep.subr.mxu0 %v464
      %1321 = vmatpush1.msra.mxu0 %v463
      %1322 = vmatprep.subr.mxu0 %v468
      %1323 = vmatpush1.msra.mxu0 %v467
      %1324 = vmatprep.subr.mxu0 %v472
      %1325 = vmatpush1.msra.mxu0 %v471
      %1326 = vmatprep.subr.mxu0 %v476
      %1327 = vmatpush1.msra.mxu0 %v475
      %1328 = vmatprep.subr.mxu0 %v480
      %1329 = vmatpush1.msra.mxu0 %v479
      %1330 = vmatprep.subr.mxu0 %v484
      %1331 = vmatpush1.msra.mxu0 %v483
      %1332 = vmatprep.subr.mxu0 %v488
      %1333 = vmatpush1.msra.mxu0 %v487
      %1334 = vmatprep.subr.mxu0 %v492
      %1335 = vmatpush1.msra.mxu0 %v491
      %1336 = vmatprep.subr.mxu0 %v496
      %1337 = vmatpush1.msra.mxu0 %v495
      %1338 = vmatprep.subr.mxu0 %v500
      %1339 = vmatpush1.msra.mxu0 %v499
      %1340 = vmatprep.subr.mxu0 %v504
      %1341 = vmatpush1.msra.mxu0 %v503
      %1342 = vmatprep.subr.mxu0 0.0
      %1343 = vmatpush1.msra.mxu0 0.0
      %1344 = vmatprep.subr.mxu0 0.0
      %1345 = vmatpush1.msra.mxu0 0.0
      %1346 = vmatprep.subr.mxu0 0.0
      %1347 = vmatpush1.msra.mxu0 0.0
      %1348 = vmatprep.subr.mxu0 0.0
      %1349 = vmatpush1.msra.mxu0 0.0
      %1350 = vmatprep.subr.mxu0 0.0
      %1351 = vmatpush1.msra.mxu0 0.0
      %1352 = vmatprep.subr.mxu0 0.0
      %1353 = vmatpush1.msra.mxu0 0.0
      %1354 = vmatprep.subr.mxu0 0.0
      %1355 = vmatpush1.msra.mxu0 0.0
      %1356 = vmatprep.subr.mxu0 0.0
      %1357 = vmatpush1.msra.mxu0 0.0
      %1358 = vmatprep.subr.mxu0 0.0
      %1359 = vmatpush1.msra.mxu0 0.0
      %1360 = vmatprep.subr.mxu0 0.0
      %1361 = vmatpush1.msra.mxu0 0.0
      %1362 = vmatprep.subr.mxu0 0.0
      %1363 = vmatpush1.msra.mxu0 0.0
      %1364 = vmatprep.subr.mxu0 0.0
      %1365 = vmatpush1.msra.mxu0 0.0
      %1366 = vmatprep.subr.mxu0 0.0
      %1367 = vmatpush1.msra.mxu0 0.0
      %1368 = vmatprep.subr.mxu0 0.0
      %1369 = vmatpush1.msra.mxu0 0.0
      %1370 = vmatprep.subr.mxu0 0.0
      %1371 = vmatpush1.msra.mxu0 0.0
      %1372 = vmatprep.subr.mxu0 0.0
      %1373 = vmatpush1.msra.mxu0 0.0
      %1374 = vmatprep.mubr.f32.mxu0 0.0
      %1375 = vmatmul.mubr.f32.gmra.mrb[0].mxu0 %v1237
      %v1376 = vpop.f32.mrb[0].mxu0
      %v1377 = vadd.f32 0.0, %v1376
      %v1378 = vpop.f32.mrb[0].mxu0
      %v1379 = vadd.f32 0.0, %v1378
      %1380 = vdwg.mxu0
      %v1385 = vrot.slane %v1306, 4
      %v1386 = vrot.slane %v1308, 4
      %v1387 = vrot.slane %v1377, 4
      %v1388 = vrot.slane %v1379, 4
      %v1393 = vadd.f32 %v366, %v1385
      %v1394 = vadd.f32 %v368, %v1386
      %v1395 = vadd.f32 %v437, %v1387
      %v1396 = vadd.f32 %v439, %v1388
      %v1397 = vxor.u32 %v1393, 2147483648
      %v1398 = vxor.u32 %v1394, 2147483648
      %v1399 = vmul.f32 %v1397, 1.442695
      %v1400 = vpow.pop %v1399
      %v1401 = vmul.f32 %v1398, 1.442695
      %v1402 = vpow.pop %v1401
      %v1403 = vadd.f32 %v1400, 1.0
      %v1404 = vadd.f32 %v1402, 1.0
      %v1405 = vrcp.pop %v1403
      %v1406 = vmul.f32 1.0, %v1405
      %v1407 = vrcp.pop %v1404
      %v1408 = vmul.f32 1.0, %v1407
      %v1409 = vtanh.pop %v1395
      %v1411 = vrot.slane %v1227, 7
      %v1413 = vmul.f32 %v1408, %v1411
      %v1414 = vmul.f32 %v1406, %v1409
      %v1415 = vadd.f32 %v1413, %v1414
      %v1416 = vxor.u32 %v1396, 2147483648
      %v1417 = vmul.f32 %v1416, 1.442695
      %v1418 = vpow.pop %v1417
      %v1419 = vadd.f32 %v1418, 1.0
      %v1420 = vrcp.pop %v1419
      %v1421 = vmul.f32 1.0, %v1420
      %v1422 = vtanh.pop %v1415
      %v1423 = vmul.f32 %v1421, %v1422
      %v1425 = vrot.slane %v1423, 4
      %1427 = vmatprep.subr.mxu0 %v442
      %1428 = vmatpush1.msra.mxu0 %v441
      %1429 = vmatprep.subr.mxu0 %v446
      %1430 = vmatpush1.msra.mxu0 %v445
      %1431 = vmatprep.subr.mxu0 %v450
      %1432 = vmatpush1.msra.mxu0 %v449
      %1433 = vmatprep.subr.mxu0 %v454
      %1434 = vmatpush1.msra.mxu0 %v453
      %1435 = vmatprep.subr.mxu0 %v458
      %1436 = vmatpush1.msra.mxu0 %v457
      %1437 = vmatprep.subr.mxu0 %v462
      %1438 = vmatpush1.msra.mxu0 %v461
      %1439 = vmatprep.subr.mxu0 %v466
      %1440 = vmatpush1.msra.mxu0 %v465
      %1441 = vmatprep.subr.mxu0 %v470
      %1442 = vmatpush1.msra.mxu0 %v469
      %1443 = vmatprep.subr.mxu0 %v474
      %1444 = vmatpush1.msra.mxu0 %v473
      %1445 = vmatprep.subr.mxu0 %v478
      %1446 = vmatpush1.msra.mxu0 %v477
      %1447 = vmatprep.subr.mxu0 %v482
      %1448 = vmatpush1.msra.mxu0 %v481
      %1449 = vmatprep.subr.mxu0 %v486
      %1450 = vmatpush1.msra.mxu0 %v485
      %1451 = vmatprep.subr.mxu0 %v490
      %1452 = vmatpush1.msra.mxu0 %v489
      %1453 = vmatprep.subr.mxu0 %v494
      %1454 = vmatpush1.msra.mxu0 %v493
      %1455 = vmatprep.subr.mxu0 %v498
      %1456 = vmatpush1.msra.mxu0 %v497
      %1457 = vmatprep.subr.mxu0 %v502
      %1458 = vmatpush1.msra.mxu0 %v501
      %1459 = vmatprep.subr.mxu0 0.0
      %1460 = vmatpush1.msra.mxu0 0.0
      %1461 = vmatprep.subr.mxu0 0.0
      %1462 = vmatpush1.msra.mxu0 0.0
      %1463 = vmatprep.subr.mxu0 0.0
      %1464 = vmatpush1.msra.mxu0 0.0
      %1465 = vmatprep.subr.mxu0 0.0
      %1466 = vmatpush1.msra.mxu0 0.0
      %1467 = vmatprep.subr.mxu0 0.0
      %1468 = vmatpush1.msra.mxu0 0.0
      %1469 = vmatprep.subr.mxu0 0.0
      %1470 = vmatpush1.msra.mxu0 0.0
      %1471 = vmatprep.subr.mxu0 0.0
      %1472 = vmatpush1.msra.mxu0 0.0
      %1473 = vmatprep.subr.mxu0 0.0
      %1474 = vmatpush1.msra.mxu0 0.0
      %1475 = vmatprep.subr.mxu0 0.0
      %1476 = vmatpush1.msra.mxu0 0.0
      %1477 = vmatprep.subr.mxu0 0.0
      %1478 = vmatpush1.msra.mxu0 0.0
      %1479 = vmatprep.subr.mxu0 0.0
      %1480 = vmatpush1.msra.mxu0 0.0
      %1481 = vmatprep.subr.mxu0 0.0
      %1482 = vmatpush1.msra.mxu0 0.0
      %1483 = vmatprep.subr.mxu0 0.0
      %1484 = vmatpush1.msra.mxu0 0.0
      %1485 = vmatprep.subr.mxu0 0.0
      %1486 = vmatpush1.msra.mxu0 0.0
      %1487 = vmatprep.subr.mxu0 0.0
      %1488 = vmatpush1.msra.mxu0 0.0
      %1489 = vmatprep.subr.mxu0 0.0
      %1490 = vmatpush1.msra.mxu0 0.0
      %1491 = vmatprep.mubr.f32.mxu0 0.0
      %1492 = vmatmul.mubr.f32.gmra.mrb[0].mxu0 %v1425
      %v1493 = vpop.f32.mrb[0].mxu0
      %v1494 = vadd.f32 0.0, %v1493
      %v1495 = vpop.f32.mrb[0].mxu0
      %v1496 = vadd.f32 0.0, %v1495
      %1497 = vdwg.mxu0
      %1498 = vmatprep.subr.mxu0 %v444
      %1499 = vmatpush1.msra.mxu0 %v443
      %1500 = vmatprep.subr.mxu0 %v448
      %1501 = vmatpush1.msra.mxu0 %v447
      %1502 = vmatprep.subr.mxu0 %v452
      %1503 = vmatpush1.msra.mxu0 %v451
      %1504 = vmatprep.subr.mxu0 %v456
      %1505 = vmatpush1.msra.mxu0 %v455
      %1506 = vmatprep.subr.mxu0 %v460
      %1507 = vmatpush1.msra.mxu0 %v459
      %1508 = vmatprep.subr.mxu0 %v464
      %1509 = vmatpush1.msra.mxu0 %v463
      %1510 = vmatprep.subr.mxu0 %v468
      %1511 = vmatpush1.msra.mxu0 %v467
      %1512 = vmatprep.subr.mxu0 %v472
      %1513 = vmatpush1.msra.mxu0 %v471
      %1514 = vmatprep.subr.mxu0 %v476
      %1515 = vmatpush1.msra.mxu0 %v475
      %1516 = vmatprep.subr.mxu0 %v480
      %1517 = vmatpush1.msra.mxu0 %v479
      %1518 = vmatprep.subr.mxu0 %v484
      %1519 = vmatpush1.msra.mxu0 %v483
      %1520 = vmatprep.subr.mxu0 %v488
      %1521 = vmatpush1.msra.mxu0 %v487
      %1522 = vmatprep.subr.mxu0 %v492
      %1523 = vmatpush1.msra.mxu0 %v491
      %1524 = vmatprep.subr.mxu0 %v496
      %1525 = vmatpush1.msra.mxu0 %v495
      %1526 = vmatprep.subr.mxu0 %v500
      %1527 = vmatpush1.msra.mxu0 %v499
      %1528 = vmatprep.subr.mxu0 %v504
      %1529 = vmatpush1.msra.mxu0 %v503
      %1530 = vmatprep.subr.mxu0 0.0
      %1531 = vmatpush1.msra.mxu0 0.0
      %1532 = vmatprep.subr.mxu0 0.0
      %1533 = vmatpush1.msra.mxu0 0.0
      %1534 = vmatprep.subr.mxu0 0.0
      %1535 = vmatpush1.msra.mxu0 0.0
      %1536 = vmatprep.subr.mxu0 0.0
      %1537 = vmatpush1.msra.mxu0 0.0
      %1538 = vmatprep.subr.mxu0 0.0
      %1539 = vmatpush1.msra.mxu0 0.0
      %1540 = vmatprep.subr.mxu0 0.0
      %1541 = vmatpush1.msra.mxu0 0.0
      %1542 = vmatprep.subr.mxu0 0.0
      %1543 = vmatpush1.msra.mxu0 0.0
      %1544 = vmatprep.subr.mxu0 0.0
      %1545 = vmatpush1.msra.mxu0 0.0
      %1546 = vmatprep.subr.mxu0 0.0
      %1547 = vmatpush1.msra.mxu0 0.0
      %1548 = vmatprep.subr.mxu0 0.0
      %1549 = vmatpush1.msra.mxu0 0.0
      %1550 = vmatprep.subr.mxu0 0.0
      %1551 = vmatpush1.msra.mxu0 0.0
      %1552 = vmatprep.subr.mxu0 0.0
      %1553 = vmatpush1.msra.mxu0 0.0
      %1554 = vmatprep.subr.mxu0 0.0
      %1555 = vmatpush1.msra.mxu0 0.0
      %1556 = vmatprep.subr.mxu0 0.0
      %1557 = vmatpush1.msra.mxu0 0.0
      %1558 = vmatprep.subr.mxu0 0.0
      %1559 = vmatpush1.msra.mxu0 0.0
      %1560 = vmatprep.subr.mxu0 0.0
      %1561 = vmatpush1.msra.mxu0 0.0
      %1562 = vmatprep.mubr.f32.mxu0 0.0
      %1563 = vmatmul.mubr.f32.gmra.mrb[0].mxu0 %v1425
      %v1564 = vpop.f32.mrb[0].mxu0
      %v1565 = vadd.f32 0.0, %v1564
      %v1566 = vpop.f32.mrb[0].mxu0
      %v1567 = vadd.f32 0.0, %v1566
      %1568 = vdwg.mxu0
      %v1573 = vrot.slane %v1494, 3
      %v1574 = vrot.slane %v1496, 3
      %v1575 = vrot.slane %v1565, 3
      %v1576 = vrot.slane %v1567, 3
      %v1581 = vadd.f32 %v366, %v1573
      %v1582 = vadd.f32 %v368, %v1574
      %v1583 = vadd.f32 %v437, %v1575
      %v1584 = vadd.f32 %v439, %v1576
      %v1585 = vxor.u32 %v1581, 2147483648
      %v1586 = vxor.u32 %v1582, 2147483648
      %v1587 = vmul.f32 %v1585, 1.442695
      %v1588 = vpow.pop %v1587
      %v1589 = vmul.f32 %v1586, 1.442695
      %v1590 = vpow.pop %v1589
      %v1591 = vadd.f32 %v1588, 1.0
      %v1592 = vadd.f32 %v1590, 1.0
      %v1593 = vrcp.pop %v1591
      %v1594 = vmul.f32 1.0, %v1593
      %v1595 = vrcp.pop %v1592
      %v1596 = vmul.f32 1.0, %v1595
      %v1597 = vtanh.pop %v1583
      %v1599 = vrot.slane %v1415, 7
      %v1601 = vmul.f32 %v1596, %v1599
      %v1602 = vmul.f32 %v1594, %v1597
      %v1603 = vadd.f32 %v1601, %v1602
      %v1604 = vxor.u32 %v1584, 2147483648
      %v1605 = vmul.f32 %v1604, 1.442695
      %v1606 = vpow.pop %v1605
      %v1607 = vadd.f32 %v1606, 1.0
      %v1608 = vrcp.pop %v1607
      %v1609 = vmul.f32 1.0, %v1608
      %v1610 = vtanh.pop %v1603
      %v1611 = vmul.f32 %v1609, %v1610
      %v1613 = vrot.slane %v1611, 5
      %1615 = vmatprep.subr.mxu0 %v442
      %1616 = vmatpush1.msra.mxu0 %v441
      %1617 = vmatprep.subr.mxu0 %v446
      %1618 = vmatpush1.msra.mxu0 %v445
      %1619 = vmatprep.subr.mxu0 %v450
      %1620 = vmatpush1.msra.mxu0 %v449
      %1621 = vmatprep.subr.mxu0 %v454
      %1622 = vmatpush1.msra.mxu0 %v453
      %1623 = vmatprep.subr.mxu0 %v458
      %1624 = vmatpush1.msra.mxu0 %v457
      %1625 = vmatprep.subr.mxu0 %v462
      %1626 = vmatpush1.msra.mxu0 %v461
      %1627 = vmatprep.subr.mxu0 %v466
      %1628 = vmatpush1.msra.mxu0 %v465
      %1629 = vmatprep.subr.mxu0 %v470
      %1630 = vmatpush1.msra.mxu0 %v469
      %1631 = vmatprep.subr.mxu0 %v474
      %1632 = vmatpush1.msra.mxu0 %v473
      %1633 = vmatprep.subr.mxu0 %v478
      %1634 = vmatpush1.msra.mxu0 %v477
      %1635 = vmatprep.subr.mxu0 %v482
      %1636 = vmatpush1.msra.mxu0 %v481
      %1637 = vmatprep.subr.mxu0 %v486
      %1638 = vmatpush1.msra.mxu0 %v485
      %1639 = vmatprep.subr.mxu0 %v490
      %1640 = vmatpush1.msra.mxu0 %v489
      %1641 = vmatprep.subr.mxu0 %v494
      %1642 = vmatpush1.msra.mxu0 %v493
      %1643 = vmatprep.subr.mxu0 %v498
      %1644 = vmatpush1.msra.mxu0 %v497
      %1645 = vmatprep.subr.mxu0 %v502
      %1646 = vmatpush1.msra.mxu0 %v501
      %1647 = vmatprep.subr.mxu0 0.0
      %1648 = vmatpush1.msra.mxu0 0.0
      %1649 = vmatprep.subr.mxu0 0.0
      %1650 = vmatpush1.msra.mxu0 0.0
      %1651 = vmatprep.subr.mxu0 0.0
      %1652 = vmatpush1.msra.mxu0 0.0
      %1653 = vmatprep.subr.mxu0 0.0
      %1654 = vmatpush1.msra.mxu0 0.0
      %1655 = vmatprep.subr.mxu0 0.0
      %1656 = vmatpush1.msra.mxu0 0.0
      %1657 = vmatprep.subr.mxu0 0.0
      %1658 = vmatpush1.msra.mxu0 0.0
      %1659 = vmatprep.subr.mxu0 0.0
      %1660 = vmatpush1.msra.mxu0 0.0
      %1661 = vmatprep.subr.mxu0 0.0
      %1662 = vmatpush1.msra.mxu0 0.0
      %1663 = vmatprep.subr.mxu0 0.0
      %1664 = vmatpush1.msra.mxu0 0.0
      %1665 = vmatprep.subr.mxu0 0.0
      %1666 = vmatpush1.msra.mxu0 0.0
      %1667 = vmatprep.subr.mxu0 0.0
      %1668 = vmatpush1.msra.mxu0 0.0
      %1669 = vmatprep.subr.mxu0 0.0
      %1670 = vmatpush1.msra.mxu0 0.0
      %1671 = vmatprep.subr.mxu0 0.0
      %1672 = vmatpush1.msra.mxu0 0.0
      %1673 = vmatprep.subr.mxu0 0.0
      %1674 = vmatpush1.msra.mxu0 0.0
      %1675 = vmatprep.subr.mxu0 0.0
      %1676 = vmatpush1.msra.mxu0 0.0
      %1677 = vmatprep.subr.mxu0 0.0
      %1678 = vmatpush1.msra.mxu0 0.0
      %1679 = vmatprep.mubr.f32.mxu0 0.0
      %1680 = vmatmul.mubr.f32.gmra.mrb[0].mxu0 %v1613
      %v1681 = vpop.f32.mrb[0].mxu0
      %v1682 = vadd.f32 0.0, %v1681
      %v1683 = vpop.f32.mrb[0].mxu0
      %v1684 = vadd.f32 0.0, %v1683
      %1685 = vdwg.mxu0
      %1686 = vmatprep.subr.mxu0 %v444
      %1687 = vmatpush1.msra.mxu0 %v443
      %1688 = vmatprep.subr.mxu0 %v448
      %1689 = vmatpush1.msra.mxu0 %v447
      %1690 = vmatprep.subr.mxu0 %v452
      %1691 = vmatpush1.msra.mxu0 %v451
      %1692 = vmatprep.subr.mxu0 %v456
      %1693 = vmatpush1.msra.mxu0 %v455
      %1694 = vmatprep.subr.mxu0 %v460
      %1695 = vmatpush1.msra.mxu0 %v459
      %1696 = vmatprep.subr.mxu0 %v464
      %1697 = vmatpush1.msra.mxu0 %v463
      %1698 = vmatprep.subr.mxu0 %v468
      %1699 = vmatpush1.msra.mxu0 %v467
      %1700 = vmatprep.subr.mxu0 %v472
      %1701 = vmatpush1.msra.mxu0 %v471
      %1702 = vmatprep.subr.mxu0 %v476
      %1703 = vmatpush1.msra.mxu0 %v475
      %1704 = vmatprep.subr.mxu0 %v480
      %1705 = vmatpush1.msra.mxu0 %v479
      %1706 = vmatprep.subr.mxu0 %v484
      %1707 = vmatpush1.msra.mxu0 %v483
      %1708 = vmatprep.subr.mxu0 %v488
      %1709 = vmatpush1.msra.mxu0 %v487
      %1710 = vmatprep.subr.mxu0 %v492
      %1711 = vmatpush1.msra.mxu0 %v491
      %1712 = vmatprep.subr.mxu0 %v496
      %1713 = vmatpush1.msra.mxu0 %v495
      %1714 = vmatprep.subr.mxu0 %v500
      %1715 = vmatpush1.msra.mxu0 %v499
      %1716 = vmatprep.subr.mxu0 %v504
      %1717 = vmatpush1.msra.mxu0 %v503
      %1718 = vmatprep.subr.mxu0 0.0
      %1719 = vmatpush1.msra.mxu0 0.0
      %1720 = vmatprep.subr.mxu0 0.0
      %1721 = vmatpush1.msra.mxu0 0.0
      %1722 = vmatprep.subr.mxu0 0.0
      %1723 = vmatpush1.msra.mxu0 0.0
      %1724 = vmatprep.subr.mxu0 0.0
      %1725 = vmatpush1.msra.mxu0 0.0
      %1726 = vmatprep.subr.mxu0 0.0
      %1727 = vmatpush1.msra.mxu0 0.0
      %1728 = vmatprep.subr.mxu0 0.0
      %1729 = vmatpush1.msra.mxu0 0.0
      %1730 = vmatprep.subr.mxu0 0.0
      %1731 = vmatpush1.msra.mxu0 0.0
      %1732 = vmatprep.subr.mxu0 0.0
      %1733 = vmatpush1.msra.mxu0 0.0
      %1734 = vmatprep.subr.mxu0 0.0
      %1735 = vmatpush1.msra.mxu0 0.0
      %1736 = vmatprep.subr.mxu0 0.0
      %1737 = vmatpush1.msra.mxu0 0.0
      %1738 = vmatprep.subr.mxu0 0.0
      %1739 = vmatpush1.msra.mxu0 0.0
      %1740 = vmatprep.subr.mxu0 0.0
      %1741 = vmatpush1.msra.mxu0 0.0
      %1742 = vmatprep.subr.mxu0 0.0
      %1743 = vmatpush1.msra.mxu0 0.0
      %1744 = vmatprep.subr.mxu0 0.0
      %1745 = vmatpush1.msra.mxu0 0.0
      %1746 = vmatprep.subr.mxu0 0.0
      %1747 = vmatpush1.msra.mxu0 0.0
      %1748 = vmatprep.subr.mxu0 0.0
      %1749 = vmatpush1.msra.mxu0 0.0
      %1750 = vmatprep.mubr.f32.mxu0 0.0
      %1751 = vmatmul.mubr.f32.gmra.mrb[0].mxu0 %v1613
      %v1752 = vpop.f32.mrb[0].mxu0
      %v1753 = vadd.f32 0.0, %v1752
      %v1754 = vpop.f32.mrb[0].mxu0
      %v1755 = vadd.f32 0.0, %v1754
      %1756 = vdwg.mxu0
      %v1761 = vrot.slane %v1682, 2
      %v1762 = vrot.slane %v1684, 2
      %v1763 = vrot.slane %v1753, 2
      %v1764 = vrot.slane %v1755, 2
      %v1769 = vadd.f32 %v366, %v1761
      %v1770 = vadd.f32 %v368, %v1762
      %v1771 = vadd.f32 %v437, %v1763
      %v1772 = vadd.f32 %v439, %v1764
      %v1773 = vxor.u32 %v1769, 2147483648
      %v1774 = vxor.u32 %v1770, 2147483648
      %v1775 = vmul.f32 %v1773, 1.442695
      %v1776 = vpow.pop %v1775
      %v1777 = vmul.f32 %v1774, 1.442695
      %v1778 = vpow.pop %v1777
      %v1779 = vadd.f32 %v1776, 1.0
      %v1780 = vadd.f32 %v1778, 1.0
      %v1781 = vrcp.pop %v1779
      %v1782 = vmul.f32 1.0, %v1781
      %v1783 = vrcp.pop %v1780
      %v1784 = vmul.f32 1.0, %v1783
      %v1785 = vtanh.pop %v1771
      %v1787 = vrot.slane %v1603, 7
      %v1789 = vmul.f32 %v1784, %v1787
      %v1790 = vmul.f32 %v1782, %v1785
      %v1791 = vadd.f32 %v1789, %v1790
      %v1792 = vxor.u32 %v1772, 2147483648
      %v1793 = vmul.f32 %v1792, 1.442695
      %v1794 = vpow.pop %v1793
      %v1795 = vadd.f32 %v1794, 1.0
      %v1796 = vrcp.pop %v1795
      %v1797 = vmul.f32 1.0, %v1796
      %v1798 = vtanh.pop %v1791
      %v1799 = vmul.f32 %v1797, %v1798
      %v1801 = vrot.slane %v1799, 6
      %1803 = vmatprep.subr.mxu0 %v442
      %1804 = vmatpush1.msra.mxu0 %v441
      %1805 = vmatprep.subr.mxu0 %v446
      %1806 = vmatpush1.msra.mxu0 %v445
      %1807 = vmatprep.subr.mxu0 %v450
      %1808 = vmatpush1.msra.mxu0 %v449
      %1809 = vmatprep.subr.mxu0 %v454
      %1810 = vmatpush1.msra.mxu0 %v453
      %1811 = vmatprep.subr.mxu0 %v458
      %1812 = vmatpush1.msra.mxu0 %v457
      %1813 = vmatprep.subr.mxu0 %v462
      %1814 = vmatpush1.msra.mxu0 %v461
      %1815 = vmatprep.subr.mxu0 %v466
      %1816 = vmatpush1.msra.mxu0 %v465
      %1817 = vmatprep.subr.mxu0 %v470
      %1818 = vmatpush1.msra.mxu0 %v469
      %1819 = vmatprep.subr.mxu0 %v474
      %1820 = vmatpush1.msra.mxu0 %v473
      %1821 = vmatprep.subr.mxu0 %v478
      %1822 = vmatpush1.msra.mxu0 %v477
      %1823 = vmatprep.subr.mxu0 %v482
      %1824 = vmatpush1.msra.mxu0 %v481
      %1825 = vmatprep.subr.mxu0 %v486
      %1826 = vmatpush1.msra.mxu0 %v485
      %1827 = vmatprep.subr.mxu0 %v490
      %1828 = vmatpush1.msra.mxu0 %v489
      %1829 = vmatprep.subr.mxu0 %v494
      %1830 = vmatpush1.msra.mxu0 %v493
      %1831 = vmatprep.subr.mxu0 %v498
      %1832 = vmatpush1.msra.mxu0 %v497
      %1833 = vmatprep.subr.mxu0 %v502
      %1834 = vmatpush1.msra.mxu0 %v501
      %1835 = vmatprep.subr.mxu0 0.0
      %1836 = vmatpush1.msra.mxu0 0.0
      %1837 = vmatprep.subr.mxu0 0.0
      %1838 = vmatpush1.msra.mxu0 0.0
      %1839 = vmatprep.subr.mxu0 0.0
      %1840 = vmatpush1.msra.mxu0 0.0
      %1841 = vmatprep.subr.mxu0 0.0
      %1842 = vmatpush1.msra.mxu0 0.0
      %1843 = vmatprep.subr.mxu0 0.0
      %1844 = vmatpush1.msra.mxu0 0.0
      %1845 = vmatprep.subr.mxu0 0.0
      %1846 = vmatpush1.msra.mxu0 0.0
      %1847 = vmatprep.subr.mxu0 0.0
      %1848 = vmatpush1.msra.mxu0 0.0
      %1849 = vmatprep.subr.mxu0 0.0
      %1850 = vmatpush1.msra.mxu0 0.0
      %1851 = vmatprep.subr.mxu0 0.0
      %1852 = vmatpush1.msra.mxu0 0.0
      %1853 = vmatprep.subr.mxu0 0.0
      %1854 = vmatpush1.msra.mxu0 0.0
      %1855 = vmatprep.subr.mxu0 0.0
      %1856 = vmatpush1.msra.mxu0 0.0
      %1857 = vmatprep.subr.mxu0 0.0
      %1858 = vmatpush1.msra.mxu0 0.0
      %1859 = vmatprep.subr.mxu0 0.0
      %1860 = vmatpush1.msra.mxu0 0.0
      %1861 = vmatprep.subr.mxu0 0.0
      %1862 = vmatpush1.msra.mxu0 0.0
      %1863 = vmatprep.subr.mxu0 0.0
      %1864 = vmatpush1.msra.mxu0 0.0
      %1865 = vmatprep.subr.mxu0 0.0
      %1866 = vmatpush1.msra.mxu0 0.0
      %1867 = vmatprep.mubr.f32.mxu0 0.0
      %1868 = vmatmul.mubr.f32.gmra.mrb[0].mxu0 %v1801
      %v1869 = vpop.f32.mrb[0].mxu0
      %v1870 = vadd.f32 0.0, %v1869
      %v1871 = vpop.f32.mrb[0].mxu0
      %v1872 = vadd.f32 0.0, %v1871
      %1873 = vdwg.mxu0
      %1874 = vmatprep.subr.mxu0 %v444
      %1875 = vmatpush1.msra.mxu0 %v443
      %1876 = vmatprep.subr.mxu0 %v448
      %1877 = vmatpush1.msra.mxu0 %v447
      %1878 = vmatprep.subr.mxu0 %v452
      %1879 = vmatpush1.msra.mxu0 %v451
      %1880 = vmatprep.subr.mxu0 %v456
      %1881 = vmatpush1.msra.mxu0 %v455
      %1882 = vmatprep.subr.mxu0 %v460
      %1883 = vmatpush1.msra.mxu0 %v459
      %1884 = vmatprep.subr.mxu0 %v464
      %1885 = vmatpush1.msra.mxu0 %v463
      %1886 = vmatprep.subr.mxu0 %v468
      %1887 = vmatpush1.msra.mxu0 %v467
      %1888 = vmatprep.subr.mxu0 %v472
      %1889 = vmatpush1.msra.mxu0 %v471
      %1890 = vmatprep.subr.mxu0 %v476
      %1891 = vmatpush1.msra.mxu0 %v475
      %1892 = vmatprep.subr.mxu0 %v480
      %1893 = vmatpush1.msra.mxu0 %v479
      %1894 = vmatprep.subr.mxu0 %v484
      %1895 = vmatpush1.msra.mxu0 %v483
      %1896 = vmatprep.subr.mxu0 %v488
      %1897 = vmatpush1.msra.mxu0 %v487
      %1898 = vmatprep.subr.mxu0 %v492
      %1899 = vmatpush1.msra.mxu0 %v491
      %1900 = vmatprep.subr.mxu0 %v496
      %1901 = vmatpush1.msra.mxu0 %v495
      %1902 = vmatprep.subr.mxu0 %v500
      %1903 = vmatpush1.msra.mxu0 %v499
      %1904 = vmatprep.subr.mxu0 %v504
      %1905 = vmatpush1.msra.mxu0 %v503
      %1906 = vmatprep.subr.mxu0 0.0
      %1907 = vmatpush1.msra.mxu0 0.0
      %1908 = vmatprep.subr.mxu0 0.0
      %1909 = vmatpush1.msra.mxu0 0.0
      %1910 = vmatprep.subr.mxu0 0.0
      %1911 = vmatpush1.msra.mxu0 0.0
      %1912 = vmatprep.subr.mxu0 0.0
      %1913 = vmatpush1.msra.mxu0 0.0
      %1914 = vmatprep.subr.mxu0 0.0
      %1915 = vmatpush1.msra.mxu0 0.0
      %1916 = vmatprep.subr.mxu0 0.0
      %1917 = vmatpush1.msra.mxu0 0.0
      %1918 = vmatprep.subr.mxu0 0.0
      %1919 = vmatpush1.msra.mxu0 0.0
      %1920 = vmatprep.subr.mxu0 0.0
      %1921 = vmatpush1.msra.mxu0 0.0
      %1922 = vmatprep.subr.mxu0 0.0
      %1923 = vmatpush1.msra.mxu0 0.0
      %1924 = vmatprep.subr.mxu0 0.0
      %1925 = vmatpush1.msra.mxu0 0.0
      %1926 = vmatprep.subr.mxu0 0.0
      %1927 = vmatpush1.msra.mxu0 0.0
      %1928 = vmatprep.subr.mxu0 0.0
      %1929 = vmatpush1.msra.mxu0 0.0
      %1930 = vmatprep.subr.mxu0 0.0
      %1931 = vmatpush1.msra.mxu0 0.0
      %1932 = vmatprep.subr.mxu0 0.0
      %1933 = vmatpush1.msra.mxu0 0.0
      %1934 = vmatprep.subr.mxu0 0.0
      %1935 = vmatpush1.msra.mxu0 0.0
      %1936 = vmatprep.subr.mxu0 0.0
      %1937 = vmatpush1.msra.mxu0 0.0
      %1938 = vmatprep.mubr.f32.mxu0 0.0
      %1939 = vmatmul.mubr.f32.gmra.mrb[0].mxu0 %v1801
      %v1940 = vpop.f32.mrb[0].mxu0
      %v1941 = vadd.f32 0.0, %v1940
      %v1942 = vpop.f32.mrb[0].mxu0
      %v1943 = vadd.f32 0.0, %v1942
      %1944 = vdwg.mxu0
      %v1949 = vrot.slane %v1870, 1
      %v1950 = vrot.slane %v1872, 1
      %v1951 = vrot.slane %v1941, 1
      %v1952 = vrot.slane %v1943, 1
      %v1957 = vadd.f32 %v366, %v1949
      %v1958 = vadd.f32 %v368, %v1950
      %v1959 = vadd.f32 %v437, %v1951
      %v1960 = vadd.f32 %v439, %v1952
      %v1961 = vxor.u32 %v1957, 2147483648
      %v1962 = vxor.u32 %v1958, 2147483648
      %v1963 = vmul.f32 %v1961, 1.442695
      %v1964 = vpow.pop %v1963
      %v1965 = vmul.f32 %v1962, 1.442695
      %v1966 = vpow.pop %v1965
      %v1967 = vadd.f32 %v1964, 1.0
      %v1968 = vadd.f32 %v1966, 1.0
      %v1969 = vrcp.pop %v1967
      %v1970 = vmul.f32 1.0, %v1969
      %v1971 = vrcp.pop %v1968
      %v1972 = vmul.f32 1.0, %v1971
      %v1973 = vtanh.pop %v1959
      %v1975 = vrot.slane %v1791, 7
      %v1977 = vmul.f32 %v1972, %v1975
      %v1978 = vmul.f32 %v1970, %v1973
      %v1979 = vadd.f32 %v1977, %v1978
      %v1980 = vxor.u32 %v1960, 2147483648
      %v1981 = vmul.f32 %v1980, 1.442695
      %v1982 = vpow.pop %v1981
      %v1983 = vadd.f32 %v1982, 1.0
      %v1984 = vrcp.pop %v1983
      %v1985 = vmul.f32 1.0, %v1984
      %v1986 = vtanh.pop %v1979
      %v1987 = vmul.f32 %v1985, %v1986
      %v1988 = vld [vmem:[%s4] sm:$0x1]
      %v1990 = vlaneseq
      %v1991 = vshrl.u32 %v1990, 7
      %v1992 = vsub.s32 0, %v1991
      %v1993 = vrot.slane %v1988, %v1992
      %v1995 = vmul.f32 %v1987, %v1993
      %vm1996 = vcmask 1047559
      %v1997 = vsel %vm1996, %v1995, 0.0
      %1998 = vadd.xlane.f32.xlu0 %v1997
      %v1999 = vpop.xlane.xlu0 %1998
      %v2000 = vld [vmem:[#allocation2] sm:$0x1]
      %v2002 = vlaneseq
      %v2003 = vshrl.u32 %v2002, 7
      %v2004 = vsub.s32 0, %v2003
      %v2005 = vrot.slane %v2000, %v2004
      %v2007 = vadd.f32 %v1999, %v2005
      %v2008 = vxor.u32 %v2007, 2147483648
      %v2009 = vmul.f32 %v2008, 1.442695
      %v2010 = vpow.pop %v2009
      %v2011 = vadd.f32 %v2010, 1.0
      %v2012 = vrcp.pop %v2011
      %v2013 = vmul.f32 1.0, %v2012
      %vm2014 = vcmask 7175
      %2015 = vst.msk [vmem:[%s246 - $0x7] sm:$0x80] %vm2014, %v2013
      %p2016 = scmp.lt.s32.totalorder %s19, 1
      %s2017 = scalar_select %p2016, %s19, 1
      %s2018 = scalar_lea.vmem %s6, %s2017
      // Predicated region
      $region45: #{seizure_lstm_forward.1} parent=43 // pred_check
        %p2019 = pneg %p168
      $region46: #{seizure_lstm_forward.1} parent=43 // pred_check_branch
        %2021 = sbr.rel (%p2019) target = $region48
      $region47: #{seizure_lstm_forward.1} parent=43 // pred_region
        _
      $region48: #{seizure_lstm_forward.1} parent=43 // pred_fallthru
        _
    $region44: #{seizure_lstm_forward.1} parent=5 // pred_fallthru
      _
    %p2022 = scmp.le.s32.totalorder 2, %s14
    // Predicated region
    $region49: #{seizure_lstm_forward.1} parent=5 // pred_check
      %p2023 = pneg %p2022
    $region50: #{seizure_lstm_forward.1} parent=5 // pred_check_branch
      %2025 = sbr.rel (%p2023) target = $region52
    $region51: #{seizure_lstm_forward.1} parent=5 // pred_region
      %s2026 = ssub.s32 %s14, 2
      // Predicated region
      $region53: #{seizure_lstm_forward.1} parent=51 // pred_check
        %p2027 = pneg %p174
      $region54: #{seizure_lstm_forward.1} parent=51 // pred_check_branch
        %2029 = sbr.rel (%p2027) target = $region56
      $region55: #{seizure_lstm_forward.1} parent=51 // pred_region
        %p2030 = scmp.lt.s32.totalorder %s20, 1
        %s2031 = scalar_select %p2030, %s20, 1
        %s2032 = scalar_lea.vmem %s6, %s2031
      $region56: #{seizure_lstm_forward.1} parent=51 // pred_fallthru
        _
    $region52: #{seizure_lstm_forward.1} parent=5 // pred_fallthru
      _
  $region6: #{seizure_lstm_forward.1} parent=0 // loop_footer
    %s18 = sadd.s32 1, %s14
  $region7: #{seizure_lstm_forward.1} parent=0 // loop_footer_branch
    %13 = sbr.rel target = $region3
  $region8: #{seizure_lstm_forward.1} parent=0 // loop_exit
    _

</llo_original>
